<compile_context>
chip_gen: v7x
topology: tpu7x:2x2x1
jax: 0.10.0
libtpu: 0.0.40
codegen_flags: <defaults>
</compile_context>

<pallas_src>
import math
import functools

import jax
import jax.numpy as jnp
from jax.experimental import pallas as pl
from jax.experimental.pallas import tpu as pltpu


# ----------------------------- static helpers ------------------------------

def _adaptive_bins(in_size, out_size):
    """PyTorch AdaptiveMaxPool2d bin boundaries [start, end) per output idx."""
    return [((i * in_size) // out_size, math.ceil((i + 1) * in_size / out_size))
            for i in range(out_size)]


def _nested_members(fine_bins, coarse_bin):
    """Indices of fine bins whose union is exactly the coarse bin, else None."""
    a, b = coarse_bin
    members = [i for i, (f0, f1) in enumerate(fine_bins) if a <= f0 and f1 <= b]
    if not members:
        return None
    ivs = sorted(fine_bins[i] for i in members)
    if ivs[0][0] != a:
        return None
    cover = a
    for f0, f1 in ivs:
        if f0 > cover:
            return None
        cover = max(cover, f1)
    return members if cover == b else None


def _bilinear_matrix(out_size, in_size):
    """(out_size, in_size) interpolation matrix, align_corners=True."""
    m = [[0.0] * in_size for _ in range(out_size)]
    for o in range(out_size):
        if out_size == 1 or in_size == 1:
            src = 0.0
        else:
            src = o * (in_size - 1) / (out_size - 1)
        i0 = min(int(math.floor(src)), in_size - 1)
        i1 = min(i0 + 1, in_size - 1)
        w1 = src - i0
        m[o][i0] += 1.0 - w1
        m[o][i1] += w1
    return jnp.array(m, dtype=jnp.float32)


def _upsample_matrix_T(H, W, p):
    """(p*p, H*W) transposed bilinear upsample matrix (align_corners=True).

    Row index qr*p+qc (row-major pooled flattening), column index h*W+w, so
    slab_T = blockdiag(conv_T) @ R_all_T upsamples every branch in ONE matmul
    with the result already laid out channel-major / spatial-on-lanes."""
    ry = _bilinear_matrix(H, p)                      # (H, p) indexed [h, qr]
    rx = _bilinear_matrix(W, p)                      # (W, p) indexed [w, qc]
    return jnp.einsum("hr,wc->rchw", ry, rx).reshape(p * p, H * W)


# --------------------- fused PSP head kernel (per batch) --------------------

def _psp_fused_kernel(x4_ref, xf_ref, w1_ref, b1_ref, r_ref, w2_ref, b2_ref,
                      conv_ref, sum_ref, ssq_ref,
                      *, pools, H, W, Cin, Cout):
    HW = H * W
    G = len(pools)
    Ctot = Cin + G * Cout
    bf16 = jnp.bfloat16

    x4 = x4_ref[0]                       # (Cin, H, W)  f32 — pooling view
    xf = xf_ref[0]                       # (Cin, HW)    f32 — concat/conv view

    # ---- separable adaptive max pooling (hierarchical over the row axis) ----
    p_max = max(pools)
    fine_bins = _adaptive_bins(H, p_max)
    fine_rows = [jnp.max(x4[:, r0:r1, :], axis=1)    # (Cin, W) each
                 for (r0, r1) in fine_bins]

    total_q = sum(p * p for p in pools)
    bd_rows = []
    q_off = 0
    for g, p in enumerate(pools):
        row_bins = _adaptive_bins(H, p)
        col_bins = _adaptive_bins(W, p)

        row_pooled = []
        for rb in row_bins:
            mem = _nested_members(fine_bins, rb)     # static nesting check
            if mem is not None:                      # reuse finest row maxima
                rp = functools.reduce(jnp.maximum, [fine_rows[i] for i in mem])
            else:                                    # fallback: direct slice
                rp = jnp.max(x4[:, rb[0]:rb[1], :], axis=1)
            row_pooled.append(rp)                    # (Cin, W)

        cells = []
        for rp in row_pooled:
            for (c0, c1) in col_bins:
                cells.append(jnp.max(rp[:, c0:c1], axis=1, keepdims=True))
        pooled = jnp.concatenate(cells, axis=1)      # (Cin, p*p), q = qr*p + qc

        # 1x1 conv (+bias): bf16 operands, f32 MXU accumulation.
        conv_g = jnp.dot(w1_ref[g], pooled.astype(bf16),
                         preferred_element_type=jnp.float32) + b1_ref[g]

        # Scatter into the block-diagonal (G*Cout, total_q) upsample operand.
        pieces = []
        if q_off > 0:
            pieces.append(jnp.zeros((Cout, q_off), bf16))
        pieces.append(conv_g.astype(bf16))
        rem = total_q - q_off - p * p
        if rem > 0:
            pieces.append(jnp.zeros((Cout, rem), bf16))
        bd_rows.append(pieces[0] if len(pieces) == 1
                       else jnp.concatenate(pieces, axis=1))
        q_off += p * p

    bd = jnp.concatenate(bd_rows, axis=0)            # (G*Cout, total_q) bf16

    # ---- ONE matmul upsamples all 4 branches to the concatenated PPM slab ----
    slab = jnp.dot(bd, r_ref[...],
                   preferred_element_type=jnp.float32)   # (G*Cout, HW) f32

    # ---- torch.cat([ppm(1), ppm(2), ppm(3), ppm(6), x], dim=1), in VMEM ----
    feat = jnp.concatenate([slab.astype(bf16), xf.astype(bf16)],
                           axis=0)                   # (Ctot, HW) bf16

    # ---- 3x3 conv, padding=1, as a single im2col matmul (K = 9*Ctot) ----
    col_w = jax.lax.broadcasted_iota(jnp.int32, (1, HW), 1) % W
    mask_l = col_w >= 1                              # source column w-1 valid
    mask_r = col_w <= W - 2                          # source column w+1 valid
    zpad = jnp.zeros((Ctot, W + 1), bf16)
    fpad = jnp.concatenate([zpad, feat, zpad], axis=1)   # (Ctot, HW + 2W + 2)

    taps = []
    for dy in range(3):
        for dx in range(3):
            off = (dy - 1) * W + (dx - 1)
            s = fpad[:, W + 1 + off: W + 1 + off + HW]   # (Ctot, HW)
            if dx == 0:
                s = jnp.where(mask_l, s, jnp.zeros_like(s))
            elif dx == 2:
                s = jnp.where(mask_r, s, jnp.zeros_like(s))
            taps.append(s)
    patches = jnp.concatenate(taps, axis=0)          # (9*Ctot, HW) bf16

    y = jnp.dot(w2_ref[...], patches,
                preferred_element_type=jnp.float32) + b2_ref[...]  # (Cout, HW)

    conv_ref[0] = y
    # BatchNorm partials (per-batch, f32), reduced globally in the BN kernel.
    sum_ref[0] = jnp.sum(y, axis=1, keepdims=True)
    ssq_ref[0] = jnp.sum(y * y, axis=1, keepdims=True)


def psp_fused(x_nchw, x_flat, w1_bf, b1, r_all, w2_bf, b2, pools):
    N, Cin, H, W = x_nchw.shape
    HW = H * W
    G, Cout, _ = w1_bf.shape
    Ctot = Cin + G * Cout
    Q = r_all.shape[0]

    kernel = functools.partial(_psp_fused_kernel, pools=tuple(pools),
                               H=H, W=W, Cin=Cin, Cout=Cout)
    return pl.pallas_call(
        kernel,
        out_shape=(
            jax.ShapeDtypeStruct((N, Cout, HW), jnp.float32),   # conv out
            jax.ShapeDtypeStruct((N, Cout, 1), jnp.float32),    # per-batch sum
            jax.ShapeDtypeStruct((N, Cout, 1), jnp.float32),    # per-batch sumsq
        ),
        grid=(N,),
        in_specs=[
            pl.BlockSpec((1, Cin, H, W), lambda n: (n, 0, 0, 0)),
            pl.BlockSpec((1, Cin, HW), lambda n: (n, 0, 0)),
            pl.BlockSpec((G, Cout, Cin), lambda n: (0, 0, 0)),
            pl.BlockSpec((G, Cout, 1), lambda n: (0, 0, 0)),
            pl.BlockSpec((Q, HW), lambda n: (0, 0)),
            pl.BlockSpec((Cout, 9 * Ctot), lambda n: (0, 0)),
            pl.BlockSpec((Cout, 1), lambda n: (0, 0)),
        ],
        out_specs=(
            pl.BlockSpec((1, Cout, HW), lambda n: (n, 0, 0)),
            pl.BlockSpec((1, Cout, 1), lambda n: (n, 0, 0)),
            pl.BlockSpec((1, Cout, 1), lambda n: (n, 0, 0)),
        ),
        compiler_params=pltpu.CompilerParams(
            dimension_semantics=("parallel",)),
    )(x_nchw, x_flat, w1_bf, b1, r_all, w2_bf, b2)


# --------------------------- BatchNorm + ReLU --------------------------------

def _bn_relu_kernel(conv_ref, sums_ref, ssq_ref, g_ref, beta_ref, o_ref,
                    *, count, eps):
    x = conv_ref[0]                                  # (Cout, HW) f32
    s = jnp.sum(sums_ref[...], axis=0)               # (Cout, 1) global sum
    ss = jnp.sum(ssq_ref[...], axis=0)               # (Cout, 1) global sumsq
    mean = s / count
    var = jnp.maximum(ss / count - mean * mean, 0.0)  # biased (train-mode)
    inv = jax.lax.rsqrt(var + eps)
    scale = g_ref[...] * inv                         # (Cout, 1)
    shift = beta_ref[...] - mean * scale             # (Cout, 1)
    o_ref[0] = jnp.maximum(x * scale + shift, 0.0)   # BN affine + ReLU


def bn_relu(conv, sums, ssq, gamma, beta, eps=1e-5):
    N, Cout, HW = conv.shape
    count = float(N * HW)
    kernel = functools.partial(_bn_relu_kernel, count=count, eps=eps)
    return pl.pallas_call(
        kernel,
        out_shape=jax.ShapeDtypeStruct((N, Cout, HW), jnp.float32),
        grid=(N,),
        in_specs=[
            pl.BlockSpec((1, Cout, HW), lambda n: (n, 0, 0)),
            pl.BlockSpec((N, Cout, 1), lambda n: (0, 0, 0)),
            pl.BlockSpec((N, Cout, 1), lambda n: (0, 0, 0)),
            pl.BlockSpec((Cout, 1), lambda n: (0, 0)),
            pl.BlockSpec((Cout, 1), lambda n: (0, 0)),
        ],
        out_specs=pl.BlockSpec((1, Cout, HW), lambda n: (n, 0, 0)),
        compiler_params=pltpu.CompilerParams(
            dimension_semantics=("parallel",)),
    )(conv, sums, ssq, gamma.reshape(Cout, 1), beta.reshape(Cout, 1))


# ------------------------------- PSPHEAD ------------------------------------

POOL_SIZES = [1, 2, 3, 6]


def init_params(key, in_channels, out_channels, pool_sizes=POOL_SIZES):
    G = len(pool_sizes)
    c_tot = in_channels + G * out_channels
    k1, k2, k3, k4 = jax.random.split(key, 4)
    # PPM 1x1 convs: w1[g] is (Cout, Cin)  (== torch weight[:, :, 0, 0])
    w1 = 0.1 * jax.random.normal(k1, (G, out_channels, in_channels), jnp.float32)
    b1 = 0.1 * jax.random.normal(k2, (G, out_channels), jnp.float32)
    # Final 3x3 conv: torch layout (Cout, Ctot, kh, kw); input-channel order
    # matches torch.cat([ppm(1), ppm(2), ppm(3), ppm(6), x], dim=1).
    w_final = 0.05 * jax.random.normal(k3, (out_channels, c_tot, 3, 3),
                                       jnp.float32)
    b_final = 0.05 * jax.random.normal(k4, (out_channels,), jnp.float32)
    gamma = jnp.ones((out_channels,), jnp.float32)   # BN default init
    beta = jnp.zeros((out_channels,), jnp.float32)
    return dict(w1=w1, b1=b1, w_final=w_final, b_final=b_final,
                gamma=gamma, beta=beta)


def psphead_forward(x_nchw, params, pool_sizes=POOL_SIZES):
    N, Cin, H, W = x_nchw.shape
    HW = H * W
    G, Cout, _ = params["w1"].shape
    Ctot = Cin + G * Cout

    # Kernel-ready views / weights (tiny host-side prep, no activation copies):
    x_flat = x_nchw.reshape(N, Cin, HW)              # free reshape (NCHW contig)
    w1_bf = params["w1"].astype(jnp.bfloat16)        # (G, Cout, Cin)
    b1 = params["b1"].reshape(G, Cout, 1)
    r_all = jnp.concatenate([_upsample_matrix_T(H, W, p) for p in pool_sizes],
                            axis=0).astype(jnp.bfloat16)          # (Q, HW)
    # (Cout, Ctot, 3, 3) -> (Cout, 9*Ctot) with column index (dy*3+dx)*Ctot + c
    w2_bf = jnp.transpose(params["w_final"], (0, 2, 3, 1)) \
               .reshape(Cout, 9 * Ctot).astype(jnp.bfloat16)
    b2 = params["b_final"].reshape(Cout, 1)

    # 1) Fused PPM + concat + 3x3 conv + BN partials (one kernel, no HBM slab).
    conv, sums, ssq = psp_fused(x_nchw, x_flat, w1_bf, b1, r_all, w2_bf, b2,
                                pool_sizes)
    # 2) BatchNorm (train-mode batch stats) + ReLU, written channel-major.
    y = bn_relu(conv, sums, ssq, params["gamma"], params["beta"])
    return y.reshape(N, Cout, H, W)                  # NCHW, free reshape


# --------------------------------- main --------------------------------------

if __name__ == "__main__":
    # Small shapes consistent with the module's forward:
    # batch=2, in_channels=4, out_channels=4, spatial=16x16.
    N, C_IN, H, W = 2, 4, 16, 16
    C_OUT = 4

    key = jax.random.PRNGKey(0)
    kx, kp = jax.random.split(key)
    x = jax.random.normal(kx, (N, C_IN, H, W), jnp.float32)
    params = init_params(kp, C_IN, C_OUT)

    out = psphead_forward(x, params)
    out = jax.block_until_ready(out)
    assert out.shape == (N, C_OUT, H, W), out.shape
    assert bool(jnp.all(jnp.isfinite(out)))
    # note: num_classes in __init__ is unused by the reference forward pass.
    print("KERNEL_OK")
</pallas_src>

<mosaic_0001>
module attributes {stable_mosaic.version = 11 : i64} {
  func.func @_psp_fused_kernel(%arg0: i32, %arg1: memref<1x4x16x16xf32, #tpu.memory_space<vmem>>, %arg2: memref<1x4x256xf32, #tpu.memory_space<vmem>>, %arg3: memref<4x4x4xbf16, #tpu.memory_space<vmem>>, %arg4: memref<4x4x1xf32, #tpu.memory_space<vmem>>, %arg5: memref<50x256xbf16, #tpu.memory_space<vmem>>, %arg6: memref<4x180xbf16, #tpu.memory_space<vmem>>, %arg7: memref<4x1xf32, #tpu.memory_space<vmem>>, %arg8: memref<1x4x256xf32, #tpu.memory_space<vmem>>, %arg9: memref<1x4x1xf32, #tpu.memory_space<vmem>>, %arg10: memref<1x4x1xf32, #tpu.memory_space<vmem>>) attributes {dimension_semantics = [#tpu.dimension_semantics<parallel>], iteration_bounds = array<i64: 2>, scalar_prefetch = 0 : i64, scratch_operands = 0 : i64, tpu.core_type = #tpu.core_type<tc>, window_params = [{transform_indices = @transform_0, window_bounds = array<i64: 1, 4, 16, 16>}, {transform_indices = @transform_1, window_bounds = array<i64: 1, 4, 256>}, {pipeline_mode = #tpu.pipeline_mode<synchronous>, transform_indices = @transform_2, window_bounds = array<i64: 4, 4, 4>}, {pipeline_mode = #tpu.pipeline_mode<synchronous>, transform_indices = @transform_3, window_bounds = array<i64: 4, 4, 1>}, {pipeline_mode = #tpu.pipeline_mode<synchronous>, transform_indices = @transform_4, window_bounds = array<i64: 50, 256>}, {pipeline_mode = #tpu.pipeline_mode<synchronous>, transform_indices = @transform_5, window_bounds = array<i64: 4, 180>}, {pipeline_mode = #tpu.pipeline_mode<synchronous>, transform_indices = @transform_6, window_bounds = array<i64: 4, 1>}, {transform_indices = @transform_7, window_bounds = array<i64: 1, 4, 256>}, {transform_indices = @transform_8, window_bounds = array<i64: 1, 4, 1>}, {transform_indices = @transform_9, window_bounds = array<i64: 1, 4, 1>}]} {
    %c0 = arith.constant 0 : index
    %c0_0 = arith.constant 0 : index
    %c0_1 = arith.constant 0 : index
    %c0_2 = arith.constant 0 : index
    %0 = vector.load %arg1[%c0, %c0_0, %c0_1, %c0_2] : memref<1x4x16x16xf32, #tpu.memory_space<vmem>>, vector<1x4x16x16xf32>
    %1 = vector.shape_cast %0 : vector<1x4x16x16xf32> to vector<4x16x16xf32>
    %c0_3 = arith.constant 0 : index
    %c0_4 = arith.constant 0 : index
    %c0_5 = arith.constant 0 : index
    %2 = vector.load %arg2[%c0_3, %c0_4, %c0_5] : memref<1x4x256xf32, #tpu.memory_space<vmem>>, vector<1x4x256xf32>
    %3 = vector.shape_cast %2 : vector<1x4x256xf32> to vector<4x256xf32>
    %4 = vector.extract_strided_slice %1 {offsets = [0, 0, 0], sizes = [4, 3, 16], strides = [1, 1, 1]} : vector<4x16x16xf32> to vector<4x3x16xf32>
    %cst = arith.constant dense<0xFF800000> : vector<4x16xf32>
    %5 = vector.multi_reduction <maximumf>, %4, %cst [1] : vector<4x3x16xf32> to vector<4x16xf32>
    %6 = vector.extract_strided_slice %1 {offsets = [0, 2, 0], sizes = [4, 4, 16], strides = [1, 1, 1]} : vector<4x16x16xf32> to vector<4x4x16xf32>
    %cst_6 = arith.constant dense<0xFF800000> : vector<4x16xf32>
    %7 = vector.multi_reduction <maximumf>, %6, %cst_6 [1] : vector<4x4x16xf32> to vector<4x16xf32>
    %8 = vector.extract_strided_slice %1 {offsets = [0, 5, 0], sizes = [4, 3, 16], strides = [1, 1, 1]} : vector<4x16x16xf32> to vector<4x3x16xf32>
    %cst_7 = arith.constant dense<0xFF800000> : vector<4x16xf32>
    %9 = vector.multi_reduction <maximumf>, %8, %cst_7 [1] : vector<4x3x16xf32> to vector<4x16xf32>
    %10 = vector.extract_strided_slice %1 {offsets = [0, 8, 0], sizes = [4, 3, 16], strides = [1, 1, 1]} : vector<4x16x16xf32> to vector<4x3x16xf32>
    %cst_8 = arith.constant dense<0xFF800000> : vector<4x16xf32>
    %11 = vector.multi_reduction <maximumf>, %10, %cst_8 [1] : vector<4x3x16xf32> to vector<4x16xf32>
    %12 = vector.extract_strided_slice %1 {offsets = [0, 10, 0], sizes = [4, 4, 16], strides = [1, 1, 1]} : vector<4x16x16xf32> to vector<4x4x16xf32>
    %cst_9 = arith.constant dense<0xFF800000> : vector<4x16xf32>
    %13 = vector.multi_reduction <maximumf>, %12, %cst_9 [1] : vector<4x4x16xf32> to vector<4x16xf32>
    %14 = vector.extract_strided_slice %1 {offsets = [0, 13, 0], sizes = [4, 3, 16], strides = [1, 1, 1]} : vector<4x16x16xf32> to vector<4x3x16xf32>
    %cst_10 = arith.constant dense<0xFF800000> : vector<4x16xf32>
    %15 = vector.multi_reduction <maximumf>, %14, %cst_10 [1] : vector<4x3x16xf32> to vector<4x16xf32>
    %16 = arith.maximumf %5, %7 : vector<4x16xf32>
    %17 = arith.maximumf %16, %9 : vector<4x16xf32>
    %18 = arith.maximumf %17, %11 : vector<4x16xf32>
    %19 = arith.maximumf %18, %13 : vector<4x16xf32>
    %20 = arith.maximumf %19, %15 : vector<4x16xf32>
    %cst_11 = arith.constant dense<0xFF800000> : vector<4xf32>
    %21 = vector.multi_reduction <maximumf>, %20, %cst_11 [1] : vector<4x16xf32> to vector<4xf32>
    %22 = vector.shape_cast %21 : vector<4xf32> to vector<4x1xf32>
    %c0_12 = arith.constant 0 : index
    %c0_13 = arith.constant 0 : index
    %c0_14 = arith.constant 0 : index
    %23 = vector.load %arg3[%c0_12, %c0_13, %c0_14] : memref<4x4x4xbf16, #tpu.memory_space<vmem>>, vector<1x4x4xbf16>
    %24 = vector.shape_cast %23 : vector<1x4x4xbf16> to vector<4x4xbf16>
    %25 = arith.truncf %22 : vector<4x1xf32> to vector<4x1xbf16>
    %cst_15 = arith.constant dense<0.000000e+00> : vector<4x1xf32>
    %26 = tpu.matmul %24, %25, %cst_15 {dimension_numbers = #tpu.dot_dimension_numbers<[1], [0], [0], [1], [0, 0, 1, 1], [], []>} : vector<4x4xbf16>, vector<4x1xbf16>, vector<4x1xf32> -> vector<4x1xf32>
    %c0_16 = arith.constant 0 : index
    %c0_17 = arith.constant 0 : index
    %c0_18 = arith.constant 0 : index
    %27 = vector.load %arg4[%c0_16, %c0_17, %c0_18] : memref<4x4x1xf32, #tpu.memory_space<vmem>>, vector<1x4x1xf32>
    %28 = vector.shape_cast %27 : vector<1x4x1xf32> to vector<4x1xf32>
    %29 = arith.addf %26, %28 : vector<4x1xf32>
    %30 = arith.truncf %29 : vector<4x1xf32> to vector<4x1xbf16>
    %cst_19 = arith.constant 0.000000e+00 : bf16
    %31 = vector.broadcast %cst_19 : bf16 to vector<4x49xbf16>
    %32 = tpu.concatenate %30, %31 in 1 : vector<4x1xbf16>, vector<4x49xbf16> -> vector<4x50xbf16>
    %33 = arith.maximumf %5, %7 : vector<4x16xf32>
    %34 = arith.maximumf %33, %9 : vector<4x16xf32>
    %35 = arith.maximumf %11, %13 : vector<4x16xf32>
    %36 = arith.maximumf %35, %15 : vector<4x16xf32>
    %37 = vector.extract_strided_slice %34 {offsets = [0, 0], sizes = [4, 8], strides = [1, 1]} : vector<4x16xf32> to vector<4x8xf32>
    %cst_20 = arith.constant dense<0xFF800000> : vector<4xf32>
    %38 = vector.multi_reduction <maximumf>, %37, %cst_20 [1] : vector<4x8xf32> to vector<4xf32>
    %39 = vector.shape_cast %38 : vector<4xf32> to vector<4x1xf32>
    %40 = vector.extract_strided_slice %34 {offsets = [0, 8], sizes = [4, 8], strides = [1, 1]} : vector<4x16xf32> to vector<4x8xf32>
    %cst_21 = arith.constant dense<0xFF800000> : vector<4xf32>
    %41 = vector.multi_reduction <maximumf>, %40, %cst_21 [1] : vector<4x8xf32> to vector<4xf32>
    %42 = vector.shape_cast %41 : vector<4xf32> to vector<4x1xf32>
    %43 = vector.extract_strided_slice %36 {offsets = [0, 0], sizes = [4, 8], strides = [1, 1]} : vector<4x16xf32> to vector<4x8xf32>
    %cst_22 = arith.constant dense<0xFF800000> : vector<4xf32>
    %44 = vector.multi_reduction <maximumf>, %43, %cst_22 [1] : vector<4x8xf32> to vector<4xf32>
    %45 = vector.shape_cast %44 : vector<4xf32> to vector<4x1xf32>
    %46 = vector.extract_strided_slice %36 {offsets = [0, 8], sizes = [4, 8], strides = [1, 1]} : vector<4x16xf32> to vector<4x8xf32>
    %cst_23 = arith.constant dense<0xFF800000> : vector<4xf32>
    %47 = vector.multi_reduction <maximumf>, %46, %cst_23 [1] : vector<4x8xf32> to vector<4xf32>
    %48 = vector.shape_cast %47 : vector<4xf32> to vector<4x1xf32>
    %49 = tpu.concatenate %39, %42, %45, %48 in 1 : vector<4x1xf32>, vector<4x1xf32>, vector<4x1xf32>, vector<4x1xf32> -> vector<4x4xf32>
    %c1 = arith.constant 1 : index
    %c0_24 = arith.constant 0 : index
    %c0_25 = arith.constant 0 : index
    %50 = vector.load %arg3[%c1, %c0_24, %c0_25] : memref<4x4x4xbf16, #tpu.memory_space<vmem>>, vector<1x4x4xbf16>
    %51 = vector.shape_cast %50 : vector<1x4x4xbf16> to vector<4x4xbf16>
    %52 = arith.truncf %49 : vector<4x4xf32> to vector<4x4xbf16>
    %cst_26 = arith.constant dense<0.000000e+00> : vector<4x4xf32>
    %53 = tpu.matmul %51, %52, %cst_26 {dimension_numbers = #tpu.dot_dimension_numbers<[1], [0], [0], [1], [0, 0, 1, 1], [], []>} : vector<4x4xbf16>, vector<4x4xbf16>, vector<4x4xf32> -> vector<4x4xf32>
    %c1_27 = arith.constant 1 : index
    %c0_28 = arith.constant 0 : index
    %c0_29 = arith.constant 0 : index
    %54 = vector.load %arg4[%c1_27, %c0_28, %c0_29] : memref<4x4x1xf32, #tpu.memory_space<vmem>>, vector<1x4x1xf32>
    %55 = vector.shape_cast %54 : vector<1x4x1xf32> to vector<4x1xf32>
    %56 = vector.broadcast %55 : vector<4x1xf32> to vector<4x4xf32>
    %57 = arith.addf %53, %56 : vector<4x4xf32>
    %cst_30 = arith.constant 0.000000e+00 : bf16
    %58 = vector.broadcast %cst_30 : bf16 to vector<4x1xbf16>
    %59 = arith.truncf %57 : vector<4x4xf32> to vector<4x4xbf16>
    %cst_31 = arith.constant 0.000000e+00 : bf16
    %60 = vector.broadcast %cst_31 : bf16 to vector<4x45xbf16>
    %61 = tpu.concatenate %58, %59, %60 in 1 : vector<4x1xbf16>, vector<4x4xbf16>, vector<4x45xbf16> -> vector<4x50xbf16>
    %62 = arith.maximumf %5, %7 : vector<4x16xf32>
    %63 = arith.maximumf %9, %11 : vector<4x16xf32>
    %64 = arith.maximumf %13, %15 : vector<4x16xf32>
    %65 = vector.extract_strided_slice %62 {offsets = [0, 0], sizes = [4, 6], strides = [1, 1]} : vector<4x16xf32> to vector<4x6xf32>
    %cst_32 = arith.constant dense<0xFF800000> : vector<4xf32>
    %66 = vector.multi_reduction <maximumf>, %65, %cst_32 [1] : vector<4x6xf32> to vector<4xf32>
    %67 = vector.shape_cast %66 : vector<4xf32> to vector<4x1xf32>
    %68 = vector.extract_strided_slice %62 {offsets = [0, 5], sizes = [4, 6], strides = [1, 1]} : vector<4x16xf32> to vector<4x6xf32>
    %cst_33 = arith.constant dense<0xFF800000> : vector<4xf32>
    %69 = vector.multi_reduction <maximumf>, %68, %cst_33 [1] : vector<4x6xf32> to vector<4xf32>
    %70 = vector.shape_cast %69 : vector<4xf32> to vector<4x1xf32>
    %71 = vector.extract_strided_slice %62 {offsets = [0, 10], sizes = [4, 6], strides = [1, 1]} : vector<4x16xf32> to vector<4x6xf32>
    %cst_34 = arith.constant dense<0xFF800000> : vector<4xf32>
    %72 = vector.multi_reduction <maximumf>, %71, %cst_34 [1] : vector<4x6xf32> to vector<4xf32>
    %73 = vector.shape_cast %72 : vector<4xf32> to vector<4x1xf32>
    %74 = vector.extract_strided_slice %63 {offsets = [0, 0], sizes = [4, 6], strides = [1, 1]} : vector<4x16xf32> to vector<4x6xf32>
    %cst_35 = arith.constant dense<0xFF800000> : vector<4xf32>
    %75 = vector.multi_reduction <maximumf>, %74, %cst_35 [1] : vector<4x6xf32> to vector<4xf32>
    %76 = vector.shape_cast %75 : vector<4xf32> to vector<4x1xf32>
    %77 = vector.extract_strided_slice %63 {offsets = [0, 5], sizes = [4, 6], strides = [1, 1]} : vector<4x16xf32> to vector<4x6xf32>
    %cst_36 = arith.constant dense<0xFF800000> : vector<4xf32>
    %78 = vector.multi_reduction <maximumf>, %77, %cst_36 [1] : vector<4x6xf32> to vector<4xf32>
    %79 = vector.shape_cast %78 : vector<4xf32> to vector<4x1xf32>
    %80 = vector.extract_strided_slice %63 {offsets = [0, 10], sizes = [4, 6], strides = [1, 1]} : vector<4x16xf32> to vector<4x6xf32>
    %cst_37 = arith.constant dense<0xFF800000> : vector<4xf32>
    %81 = vector.multi_reduction <maximumf>, %80, %cst_37 [1] : vector<4x6xf32> to vector<4xf32>
    %82 = vector.shape_cast %81 : vector<4xf32> to vector<4x1xf32>
    %83 = vector.extract_strided_slice %64 {offsets = [0, 0], sizes = [4, 6], strides = [1, 1]} : vector<4x16xf32> to vector<4x6xf32>
    %cst_38 = arith.constant dense<0xFF800000> : vector<4xf32>
    %84 = vector.multi_reduction <maximumf>, %83, %cst_38 [1] : vector<4x6xf32> to vector<4xf32>
    %85 = vector.shape_cast %84 : vector<4xf32> to vector<4x1xf32>
    %86 = vector.extract_strided_slice %64 {offsets = [0, 5], sizes = [4, 6], strides = [1, 1]} : vector<4x16xf32> to vector<4x6xf32>
    %cst_39 = arith.constant dense<0xFF800000> : vector<4xf32>
    %87 = vector.multi_reduction <maximumf>, %86, %cst_39 [1] : vector<4x6xf32> to vector<4xf32>
    %88 = vector.shape_cast %87 : vector<4xf32> to vector<4x1xf32>
    %89 = vector.extract_strided_slice %64 {offsets = [0, 10], sizes = [4, 6], strides = [1, 1]} : vector<4x16xf32> to vector<4x6xf32>
    %cst_40 = arith.constant dense<0xFF800000> : vector<4xf32>
    %90 = vector.multi_reduction <maximumf>, %89, %cst_40 [1] : vector<4x6xf32> to vector<4xf32>
    %91 = vector.shape_cast %90 : vector<4xf32> to vector<4x1xf32>
    %92 = tpu.concatenate %67, %70, %73, %76, %79, %82, %85, %88, %91 in 1 : vector<4x1xf32>, vector<4x1xf32>, vector<4x1xf32>, vector<4x1xf32>, vector<4x1xf32>, vector<4x1xf32>, vector<4x1xf32>, vector<4x1xf32>, vector<4x1xf32> -> vector<4x9xf32>
    %c2 = arith.constant 2 : index
    %c0_41 = arith.constant 0 : index
    %c0_42 = arith.constant 0 : index
    %93 = vector.load %arg3[%c2, %c0_41, %c0_42] : memref<4x4x4xbf16, #tpu.memory_space<vmem>>, vector<1x4x4xbf16>
    %94 = vector.shape_cast %93 : vector<1x4x4xbf16> to vector<4x4xbf16>
    %95 = arith.truncf %92 : vector<4x9xf32> to vector<4x9xbf16>
    %cst_43 = arith.constant dense<0.000000e+00> : vector<4x9xf32>
    %96 = tpu.matmul %94, %95, %cst_43 {dimension_numbers = #tpu.dot_dimension_numbers<[1], [0], [0], [1], [0, 0, 1, 1], [], []>} : vector<4x4xbf16>, vector<4x9xbf16>, vector<4x9xf32> -> vector<4x9xf32>
    %c2_44 = arith.constant 2 : index
    %c0_45 = arith.constant 0 : index
    %c0_46 = arith.constant 0 : index
    %97 = vector.load %arg4[%c2_44, %c0_45, %c0_46] : memref<4x4x1xf32, #tpu.memory_space<vmem>>, vector<1x4x1xf32>
    %98 = vector.shape_cast %97 : vector<1x4x1xf32> to vector<4x1xf32>
    %99 = vector.broadcast %98 : vector<4x1xf32> to vector<4x9xf32>
    %100 = arith.addf %96, %99 : vector<4x9xf32>
    %cst_47 = arith.constant 0.000000e+00 : bf16
    %101 = vector.broadcast %cst_47 : bf16 to vector<4x5xbf16>
    %102 = arith.truncf %100 : vector<4x9xf32> to vector<4x9xbf16>
    %cst_48 = arith.constant 0.000000e+00 : bf16
    %103 = vector.broadcast %cst_48 : bf16 to vector<4x36xbf16>
    %104 = tpu.concatenate %101, %102, %103 in 1 : vector<4x5xbf16>, vector<4x9xbf16>, vector<4x36xbf16> -> vector<4x50xbf16>
    %105 = vector.extract_strided_slice %5 {offsets = [0, 0], sizes = [4, 3], strides = [1, 1]} : vector<4x16xf32> to vector<4x3xf32>
    %cst_49 = arith.constant dense<0xFF800000> : vector<4xf32>
    %106 = vector.multi_reduction <maximumf>, %105, %cst_49 [1] : vector<4x3xf32> to vector<4xf32>
    %107 = vector.shape_cast %106 : vector<4xf32> to vector<4x1xf32>
    %108 = vector.extract_strided_slice %5 {offsets = [0, 2], sizes = [4, 4], strides = [1, 1]} : vector<4x16xf32> to vector<4x4xf32>
    %cst_50 = arith.constant dense<0xFF800000> : vector<4xf32>
    %109 = vector.multi_reduction <maximumf>, %108, %cst_50 [1] : vector<4x4xf32> to vector<4xf32>
    %110 = vector.shape_cast %109 : vector<4xf32> to vector<4x1xf32>
    %111 = vector.extract_strided_slice %5 {offsets = [0, 5], sizes = [4, 3], strides = [1, 1]} : vector<4x16xf32> to vector<4x3xf32>
    %cst_51 = arith.constant dense<0xFF800000> : vector<4xf32>
    %112 = vector.multi_reduction <maximumf>, %111, %cst_51 [1] : vector<4x3xf32> to vector<4xf32>
    %113 = vector.shape_cast %112 : vector<4xf32> to vector<4x1xf32>
    %114 = vector.extract_strided_slice %5 {offsets = [0, 8], sizes = [4, 3], strides = [1, 1]} : vector<4x16xf32> to vector<4x3xf32>
    %cst_52 = arith.constant dense<0xFF800000> : vector<4xf32>
    %115 = vector.multi_reduction <maximumf>, %114, %cst_52 [1] : vector<4x3xf32> to vector<4xf32>
    %116 = vector.shape_cast %115 : vector<4xf32> to vector<4x1xf32>
    %117 = vector.extract_strided_slice %5 {offsets = [0, 10], sizes = [4, 4], strides = [1, 1]} : vector<4x16xf32> to vector<4x4xf32>
    %cst_53 = arith.constant dense<0xFF800000> : vector<4xf32>
    %118 = vector.multi_reduction <maximumf>, %117, %cst_53 [1] : vector<4x4xf32> to vector<4xf32>
    %119 = vector.shape_cast %118 : vector<4xf32> to vector<4x1xf32>
    %120 = vector.extract_strided_slice %5 {offsets = [0, 13], sizes = [4, 3], strides = [1, 1]} : vector<4x16xf32> to vector<4x3xf32>
    %cst_54 = arith.constant dense<0xFF800000> : vector<4xf32>
    %121 = vector.multi_reduction <maximumf>, %120, %cst_54 [1] : vector<4x3xf32> to vector<4xf32>
    %122 = vector.shape_cast %121 : vector<4xf32> to vector<4x1xf32>
    %123 = vector.extract_strided_slice %7 {offsets = [0, 0], sizes = [4, 3], strides = [1, 1]} : vector<4x16xf32> to vector<4x3xf32>
    %cst_55 = arith.constant dense<0xFF800000> : vector<4xf32>
    %124 = vector.multi_reduction <maximumf>, %123, %cst_55 [1] : vector<4x3xf32> to vector<4xf32>
    %125 = vector.shape_cast %124 : vector<4xf32> to vector<4x1xf32>
    %126 = vector.extract_strided_slice %7 {offsets = [0, 2], sizes = [4, 4], strides = [1, 1]} : vector<4x16xf32> to vector<4x4xf32>
    %cst_56 = arith.constant dense<0xFF800000> : vector<4xf32>
    %127 = vector.multi_reduction <maximumf>, %126, %cst_56 [1] : vector<4x4xf32> to vector<4xf32>
    %128 = vector.shape_cast %127 : vector<4xf32> to vector<4x1xf32>
    %129 = vector.extract_strided_slice %7 {offsets = [0, 5], sizes = [4, 3], strides = [1, 1]} : vector<4x16xf32> to vector<4x3xf32>
    %cst_57 = arith.constant dense<0xFF800000> : vector<4xf32>
    %130 = vector.multi_reduction <maximumf>, %129, %cst_57 [1] : vector<4x3xf32> to vector<4xf32>
    %131 = vector.shape_cast %130 : vector<4xf32> to vector<4x1xf32>
    %132 = vector.extract_strided_slice %7 {offsets = [0, 8], sizes = [4, 3], strides = [1, 1]} : vector<4x16xf32> to vector<4x3xf32>
    %cst_58 = arith.constant dense<0xFF800000> : vector<4xf32>
    %133 = vector.multi_reduction <maximumf>, %132, %cst_58 [1] : vector<4x3xf32> to vector<4xf32>
    %134 = vector.shape_cast %133 : vector<4xf32> to vector<4x1xf32>
    %135 = vector.extract_strided_slice %7 {offsets = [0, 10], sizes = [4, 4], strides = [1, 1]} : vector<4x16xf32> to vector<4x4xf32>
    %cst_59 = arith.constant dense<0xFF800000> : vector<4xf32>
    %136 = vector.multi_reduction <maximumf>, %135, %cst_59 [1] : vector<4x4xf32> to vector<4xf32>
    %137 = vector.shape_cast %136 : vector<4xf32> to vector<4x1xf32>
    %138 = vector.extract_strided_slice %7 {offsets = [0, 13], sizes = [4, 3], strides = [1, 1]} : vector<4x16xf32> to vector<4x3xf32>
    %cst_60 = arith.constant dense<0xFF800000> : vector<4xf32>
    %139 = vector.multi_reduction <maximumf>, %138, %cst_60 [1] : vector<4x3xf32> to vector<4xf32>
    %140 = vector.shape_cast %139 : vector<4xf32> to vector<4x1xf32>
    %141 = vector.extract_strided_slice %9 {offsets = [0, 0], sizes = [4, 3], strides = [1, 1]} : vector<4x16xf32> to vector<4x3xf32>
    %cst_61 = arith.constant dense<0xFF800000> : vector<4xf32>
    %142 = vector.multi_reduction <maximumf>, %141, %cst_61 [1] : vector<4x3xf32> to vector<4xf32>
    %143 = vector.shape_cast %142 : vector<4xf32> to vector<4x1xf32>
    %144 = vector.extract_strided_slice %9 {offsets = [0, 2], sizes = [4, 4], strides = [1, 1]} : vector<4x16xf32> to vector<4x4xf32>
    %cst_62 = arith.constant dense<0xFF800000> : vector<4xf32>
    %145 = vector.multi_reduction <maximumf>, %144, %cst_62 [1] : vector<4x4xf32> to vector<4xf32>
    %146 = vector.shape_cast %145 : vector<4xf32> to vector<4x1xf32>
    %147 = vector.extract_strided_slice %9 {offsets = [0, 5], sizes = [4, 3], strides = [1, 1]} : vector<4x16xf32> to vector<4x3xf32>
    %cst_63 = arith.constant dense<0xFF800000> : vector<4xf32>
    %148 = vector.multi_reduction <maximumf>, %147, %cst_63 [1] : vector<4x3xf32> to vector<4xf32>
    %149 = vector.shape_cast %148 : vector<4xf32> to vector<4x1xf32>
    %150 = vector.extract_strided_slice %9 {offsets = [0, 8], sizes = [4, 3], strides = [1, 1]} : vector<4x16xf32> to vector<4x3xf32>
    %cst_64 = arith.constant dense<0xFF800000> : vector<4xf32>
    %151 = vector.multi_reduction <maximumf>, %150, %cst_64 [1] : vector<4x3xf32> to vector<4xf32>
    %152 = vector.shape_cast %151 : vector<4xf32> to vector<4x1xf32>
    %153 = vector.extract_strided_slice %9 {offsets = [0, 10], sizes = [4, 4], strides = [1, 1]} : vector<4x16xf32> to vector<4x4xf32>
    %cst_65 = arith.constant dense<0xFF800000> : vector<4xf32>
    %154 = vector.multi_reduction <maximumf>, %153, %cst_65 [1] : vector<4x4xf32> to vector<4xf32>
    %155 = vector.shape_cast %154 : vector<4xf32> to vector<4x1xf32>
    %156 = vector.extract_strided_slice %9 {offsets = [0, 13], sizes = [4, 3], strides = [1, 1]} : vector<4x16xf32> to vector<4x3xf32>
    %cst_66 = arith.constant dense<0xFF800000> : vector<4xf32>
    %157 = vector.multi_reduction <maximumf>, %156, %cst_66 [1] : vector<4x3xf32> to vector<4xf32>
    %158 = vector.shape_cast %157 : vector<4xf32> to vector<4x1xf32>
    %159 = vector.extract_strided_slice %11 {offsets = [0, 0], sizes = [4, 3], strides = [1, 1]} : vector<4x16xf32> to vector<4x3xf32>
    %cst_67 = arith.constant dense<0xFF800000> : vector<4xf32>
    %160 = vector.multi_reduction <maximumf>, %159, %cst_67 [1] : vector<4x3xf32> to vector<4xf32>
    %161 = vector.shape_cast %160 : vector<4xf32> to vector<4x1xf32>
    %162 = vector.extract_strided_slice %11 {offsets = [0, 2], sizes = [4, 4], strides = [1, 1]} : vector<4x16xf32> to vector<4x4xf32>
    %cst_68 = arith.constant dense<0xFF800000> : vector<4xf32>
    %163 = vector.multi_reduction <maximumf>, %162, %cst_68 [1] : vector<4x4xf32> to vector<4xf32>
    %164 = vector.shape_cast %163 : vector<4xf32> to vector<4x1xf32>
    %165 = vector.extract_strided_slice %11 {offsets = [0, 5], sizes = [4, 3], strides = [1, 1]} : vector<4x16xf32> to vector<4x3xf32>
    %cst_69 = arith.constant dense<0xFF800000> : vector<4xf32>
    %166 = vector.multi_reduction <maximumf>, %165, %cst_69 [1] : vector<4x3xf32> to vector<4xf32>
    %167 = vector.shape_cast %166 : vector<4xf32> to vector<4x1xf32>
    %168 = vector.extract_strided_slice %11 {offsets = [0, 8], sizes = [4, 3], strides = [1, 1]} : vector<4x16xf32> to vector<4x3xf32>
    %cst_70 = arith.constant dense<0xFF800000> : vector<4xf32>
    %169 = vector.multi_reduction <maximumf>, %168, %cst_70 [1] : vector<4x3xf32> to vector<4xf32>
    %170 = vector.shape_cast %169 : vector<4xf32> to vector<4x1xf32>
    %171 = vector.extract_strided_slice %11 {offsets = [0, 10], sizes = [4, 4], strides = [1, 1]} : vector<4x16xf32> to vector<4x4xf32>
    %cst_71 = arith.constant dense<0xFF800000> : vector<4xf32>
    %172 = vector.multi_reduction <maximumf>, %171, %cst_71 [1] : vector<4x4xf32> to vector<4xf32>
    %173 = vector.shape_cast %172 : vector<4xf32> to vector<4x1xf32>
    %174 = vector.extract_strided_slice %11 {offsets = [0, 13], sizes = [4, 3], strides = [1, 1]} : vector<4x16xf32> to vector<4x3xf32>
    %cst_72 = arith.constant dense<0xFF800000> : vector<4xf32>
    %175 = vector.multi_reduction <maximumf>, %174, %cst_72 [1] : vector<4x3xf32> to vector<4xf32>
    %176 = vector.shape_cast %175 : vector<4xf32> to vector<4x1xf32>
    %177 = vector.extract_strided_slice %13 {offsets = [0, 0], sizes = [4, 3], strides = [1, 1]} : vector<4x16xf32> to vector<4x3xf32>
    %cst_73 = arith.constant dense<0xFF800000> : vector<4xf32>
    %178 = vector.multi_reduction <maximumf>, %177, %cst_73 [1] : vector<4x3xf32> to vector<4xf32>
    %179 = vector.shape_cast %178 : vector<4xf32> to vector<4x1xf32>
    %180 = vector.extract_strided_slice %13 {offsets = [0, 2], sizes = [4, 4], strides = [1, 1]} : vector<4x16xf32> to vector<4x4xf32>
    %cst_74 = arith.constant dense<0xFF800000> : vector<4xf32>
    %181 = vector.multi_reduction <maximumf>, %180, %cst_74 [1] : vector<4x4xf32> to vector<4xf32>
    %182 = vector.shape_cast %181 : vector<4xf32> to vector<4x1xf32>
    %183 = vector.extract_strided_slice %13 {offsets = [0, 5], sizes = [4, 3], strides = [1, 1]} : vector<4x16xf32> to vector<4x3xf32>
    %cst_75 = arith.constant dense<0xFF800000> : vector<4xf32>
    %184 = vector.multi_reduction <maximumf>, %183, %cst_75 [1] : vector<4x3xf32> to vector<4xf32>
    %185 = vector.shape_cast %184 : vector<4xf32> to vector<4x1xf32>
    %186 = vector.extract_strided_slice %13 {offsets = [0, 8], sizes = [4, 3], strides = [1, 1]} : vector<4x16xf32> to vector<4x3xf32>
    %cst_76 = arith.constant dense<0xFF800000> : vector<4xf32>
    %187 = vector.multi_reduction <maximumf>, %186, %cst_76 [1] : vector<4x3xf32> to vector<4xf32>
    %188 = vector.shape_cast %187 : vector<4xf32> to vector<4x1xf32>
    %189 = vector.extract_strided_slice %13 {offsets = [0, 10], sizes = [4, 4], strides = [1, 1]} : vector<4x16xf32> to vector<4x4xf32>
    %cst_77 = arith.constant dense<0xFF800000> : vector<4xf32>
    %190 = vector.multi_reduction <maximumf>, %189, %cst_77 [1] : vector<4x4xf32> to vector<4xf32>
    %191 = vector.shape_cast %190 : vector<4xf32> to vector<4x1xf32>
    %192 = vector.extract_strided_slice %13 {offsets = [0, 13], sizes = [4, 3], strides = [1, 1]} : vector<4x16xf32> to vector<4x3xf32>
    %cst_78 = arith.constant dense<0xFF800000> : vector<4xf32>
    %193 = vector.multi_reduction <maximumf>, %192, %cst_78 [1] : vector<4x3xf32> to vector<4xf32>
    %194 = vector.shape_cast %193 : vector<4xf32> to vector<4x1xf32>
    %195 = vector.extract_strided_slice %15 {offsets = [0, 0], sizes = [4, 3], strides = [1, 1]} : vector<4x16xf32> to vector<4x3xf32>
    %cst_79 = arith.constant dense<0xFF800000> : vector<4xf32>
    %196 = vector.multi_reduction <maximumf>, %195, %cst_79 [1] : vector<4x3xf32> to vector<4xf32>
    %197 = vector.shape_cast %196 : vector<4xf32> to vector<4x1xf32>
    %198 = vector.extract_strided_slice %15 {offsets = [0, 2], sizes = [4, 4], strides = [1, 1]} : vector<4x16xf32> to vector<4x4xf32>
    %cst_80 = arith.constant dense<0xFF800000> : vector<4xf32>
    %199 = vector.multi_reduction <maximumf>, %198, %cst_80 [1] : vector<4x4xf32> to vector<4xf32>
    %200 = vector.shape_cast %199 : vector<4xf32> to vector<4x1xf32>
    %201 = vector.extract_strided_slice %15 {offsets = [0, 5], sizes = [4, 3], strides = [1, 1]} : vector<4x16xf32> to vector<4x3xf32>
    %cst_81 = arith.constant dense<0xFF800000> : vector<4xf32>
    %202 = vector.multi_reduction <maximumf>, %201, %cst_81 [1] : vector<4x3xf32> to vector<4xf32>
    %203 = vector.shape_cast %202 : vector<4xf32> to vector<4x1xf32>
    %204 = vector.extract_strided_slice %15 {offsets = [0, 8], sizes = [4, 3], strides = [1, 1]} : vector<4x16xf32> to vector<4x3xf32>
    %cst_82 = arith.constant dense<0xFF800000> : vector<4xf32>
    %205 = vector.multi_reduction <maximumf>, %204, %cst_82 [1] : vector<4x3xf32> to vector<4xf32>
    %206 = vector.shape_cast %205 : vector<4xf32> to vector<4x1xf32>
    %207 = vector.extract_strided_slice %15 {offsets = [0, 10], sizes = [4, 4], strides = [1, 1]} : vector<4x16xf32> to vector<4x4xf32>
    %cst_83 = arith.constant dense<0xFF800000> : vector<4xf32>
    %208 = vector.multi_reduction <maximumf>, %207, %cst_83 [1] : vector<4x4xf32> to vector<4xf32>
    %209 = vector.shape_cast %208 : vector<4xf32> to vector<4x1xf32>
    %210 = vector.extract_strided_slice %15 {offsets = [0, 13], sizes = [4, 3], strides = [1, 1]} : vector<4x16xf32> to vector<4x3xf32>
    %cst_84 = arith.constant dense<0xFF800000> : vector<4xf32>
    %211 = vector.multi_reduction <maximumf>, %210, %cst_84 [1] : vector<4x3xf32> to vector<4xf32>
    %212 = vector.shape_cast %211 : vector<4xf32> to vector<4x1xf32>
    %213 = tpu.concatenate %107, %110, %113, %116, %119, %122, %125, %128, %131, %134, %137, %140, %143, %146, %149, %152 in 1 : vector<4x1xf32>, vector<4x1xf32>, vector<4x1xf32>, vector<4x1xf32>, vector<4x1xf32>, vector<4x1xf32>, vector<4x1xf32>, vector<4x1xf32>, vector<4x1xf32>, vector<4x1xf32>, vector<4x1xf32>, vector<4x1xf32>, vector<4x1xf32>, vector<4x1xf32>, vector<4x1xf32>, vector<4x1xf32> -> vector<4x16xf32>
    %214 = tpu.concatenate %155, %158, %161, %164, %167, %170, %173, %176, %179, %182, %185, %188, %191, %194, %197, %200 in 1 : vector<4x1xf32>, vector<4x1xf32>, vector<4x1xf32>, vector<4x1xf32>, vector<4x1xf32>, vector<4x1xf32>, vector<4x1xf32>, vector<4x1xf32>, vector<4x1xf32>, vector<4x1xf32>, vector<4x1xf32>, vector<4x1xf32>, vector<4x1xf32>, vector<4x1xf32>, vector<4x1xf32>, vector<4x1xf32> -> vector<4x16xf32>
    %215 = tpu.concatenate %203, %206, %209, %212 in 1 : vector<4x1xf32>, vector<4x1xf32>, vector<4x1xf32>, vector<4x1xf32> -> vector<4x4xf32>
    %216 = tpu.concatenate %213, %214, %215 in 1 : vector<4x16xf32>, vector<4x16xf32>, vector<4x4xf32> -> vector<4x36xf32>
    %c3 = arith.constant 3 : index
    %c0_85 = arith.constant 0 : index
    %c0_86 = arith.constant 0 : index
    %217 = vector.load %arg3[%c3, %c0_85, %c0_86] : memref<4x4x4xbf16, #tpu.memory_space<vmem>>, vector<1x4x4xbf16>
    %218 = vector.shape_cast %217 : vector<1x4x4xbf16> to vector<4x4xbf16>
    %219 = arith.truncf %216 : vector<4x36xf32> to vector<4x36xbf16>
    %cst_87 = arith.constant dense<0.000000e+00> : vector<4x36xf32>
    %220 = tpu.matmul %218, %219, %cst_87 {dimension_numbers = #tpu.dot_dimension_numbers<[1], [0], [0], [1], [0, 0, 1, 1], [], []>} : vector<4x4xbf16>, vector<4x36xbf16>, vector<4x36xf32> -> vector<4x36xf32>
    %c3_88 = arith.constant 3 : index
    %c0_89 = arith.constant 0 : index
    %c0_90 = arith.constant 0 : index
    %221 = vector.load %arg4[%c3_88, %c0_89, %c0_90] : memref<4x4x1xf32, #tpu.memory_space<vmem>>, vector<1x4x1xf32>
    %222 = vector.shape_cast %221 : vector<1x4x1xf32> to vector<4x1xf32>
    %223 = vector.broadcast %222 : vector<4x1xf32> to vector<4x36xf32>
    %224 = arith.addf %220, %223 : vector<4x36xf32>
    %cst_91 = arith.constant 0.000000e+00 : bf16
    %225 = vector.broadcast %cst_91 : bf16 to vector<4x14xbf16>
    %226 = arith.truncf %224 : vector<4x36xf32> to vector<4x36xbf16>
    %227 = tpu.concatenate %225, %226 in 1 : vector<4x14xbf16>, vector<4x36xbf16> -> vector<4x50xbf16>
    %228 = tpu.concatenate %32, %61, %104, %227 in 0 : vector<4x50xbf16>, vector<4x50xbf16>, vector<4x50xbf16>, vector<4x50xbf16> -> vector<16x50xbf16>
    %c0_92 = arith.constant 0 : index
    %c0_93 = arith.constant 0 : index
    %229 = vector.load %arg5[%c0_92, %c0_93] : memref<50x256xbf16, #tpu.memory_space<vmem>>, vector<50x256xbf16>
    %cst_94 = arith.constant dense<0.000000e+00> : vector<16x256xf32>
    %230 = tpu.matmul %228, %229, %cst_94 {dimension_numbers = #tpu.dot_dimension_numbers<[1], [0], [0], [1], [0, 0, 1, 1], [], []>} : vector<16x50xbf16>, vector<50x256xbf16>, vector<16x256xf32> -> vector<16x256xf32>
    %231 = arith.truncf %230 : vector<16x256xf32> to vector<16x256xbf16>
    %232 = arith.truncf %3 : vector<4x256xf32> to vector<4x256xbf16>
    %233 = tpu.concatenate %231, %232 in 0 : vector<16x256xbf16>, vector<4x256xbf16> -> vector<20x256xbf16>
    %234 = tpu.iota {dimensions = array<i32: 1>} : vector<1x256xi32>
    %c16_i32 = arith.constant 16 : i32
    %c0_i32 = arith.constant 0 : i32
    %235 = arith.cmpi eq, %c16_i32, %c0_i32 : i32
    %c1_i32 = arith.constant 1 : i32
    %236 = arith.select %235, %c1_i32, %c16_i32 : i32
    %237 = vector.broadcast %236 : i32 to vector<1x256xi32>
    %238 = arith.remsi %234, %237 : vector<1x256xi32>
    %c0_i32_95 = arith.constant 0 : i32
    %239 = vector.broadcast %c0_i32_95 : i32 to vector<1x256xi32>
    %240 = arith.cmpi ne, %238, %239 : vector<1x256xi32>
    %c0_i32_96 = arith.constant 0 : i32
    %241 = vector.broadcast %c0_i32_96 : i32 to vector<1x256xi32>
    %242 = arith.cmpi slt, %238, %241 : vector<1x256xi32>
    %c0_i32_97 = arith.constant 0 : i32
    %243 = arith.cmpi slt, %236, %c0_i32_97 : i32
    %244 = vector.broadcast %243 : i1 to vector<1x256xi1>
    %245 = vector.broadcast %244 : vector<1x256xi1> to vector<1x256xi1>
    %246 = arith.xori %242, %245 : vector<1x256xi1>
    %247 = arith.andi %246, %240 : vector<1x256xi1>
    %248 = vector.broadcast %236 : i32 to vector<1x256xi32>
    %249 = arith.addi %238, %248 : vector<1x256xi32>
    %250 = arith.select %247, %249, %238 : vector<1x256xi1>, vector<1x256xi32>
    %c1_i32_98 = arith.constant 1 : i32
    %251 = vector.broadcast %c1_i32_98 : i32 to vector<1x256xi32>
    %252 = arith.cmpi sge, %250, %251 : vector<1x256xi32>
    %c14_i32 = arith.constant 14 : i32
    %253 = vector.broadcast %c14_i32 : i32 to vector<1x256xi32>
    %254 = arith.cmpi sle, %250, %253 : vector<1x256xi32>
    %cst_99 = arith.constant 0.000000e+00 : bf16
    %255 = vector.broadcast %cst_99 : bf16 to vector<20x17xbf16>
    %256 = tpu.concatenate %255, %233, %255 in 1 : vector<20x17xbf16>, vector<20x256xbf16>, vector<20x17xbf16> -> vector<20x290xbf16>
    %257 = vector.extract_strided_slice %256 {offsets = [0, 0], sizes = [20, 256], strides = [1, 1]} : vector<20x290xbf16> to vector<20x256xbf16>
    %cst_100 = arith.constant 0.000000e+00 : bf16
    %258 = vector.broadcast %cst_100 : bf16 to vector<20x256xbf16>
    %259 = vector.shape_cast %252 : vector<1x256xi1> to vector<1x256xi1>
    %260 = vector.broadcast %259 : vector<1x256xi1> to vector<20x256xi1>
    %261 = arith.select %260, %257, %258 : vector<20x256xi1>, vector<20x256xbf16>
    %262 = vector.extract_strided_slice %256 {offsets = [0, 1], sizes = [20, 256], strides = [1, 1]} : vector<20x290xbf16> to vector<20x256xbf16>
    %263 = vector.extract_strided_slice %256 {offsets = [0, 2], sizes = [20, 256], strides = [1, 1]} : vector<20x290xbf16> to vector<20x256xbf16>
    %cst_101 = arith.constant 0.000000e+00 : bf16
    %264 = vector.broadcast %cst_101 : bf16 to vector<20x256xbf16>
    %265 = vector.shape_cast %254 : vector<1x256xi1> to vector<1x256xi1>
    %266 = vector.broadcast %265 : vector<1x256xi1> to vector<20x256xi1>
    %267 = arith.select %266, %263, %264 : vector<20x256xi1>, vector<20x256xbf16>
    %268 = vector.extract_strided_slice %256 {offsets = [0, 16], sizes = [20, 256], strides = [1, 1]} : vector<20x290xbf16> to vector<20x256xbf16>
    %cst_102 = arith.constant 0.000000e+00 : bf16
    %269 = vector.broadcast %cst_102 : bf16 to vector<20x256xbf16>
    %270 = vector.shape_cast %252 : vector<1x256xi1> to vector<1x256xi1>
    %271 = vector.broadcast %270 : vector<1x256xi1> to vector<20x256xi1>
    %272 = arith.select %271, %268, %269 : vector<20x256xi1>, vector<20x256xbf16>
    %273 = vector.extract_strided_slice %256 {offsets = [0, 17], sizes = [20, 256], strides = [1, 1]} : vector<20x290xbf16> to vector<20x256xbf16>
    %274 = vector.extract_strided_slice %256 {offsets = [0, 18], sizes = [20, 256], strides = [1, 1]} : vector<20x290xbf16> to vector<20x256xbf16>
    %cst_103 = arith.constant 0.000000e+00 : bf16
    %275 = vector.broadcast %cst_103 : bf16 to vector<20x256xbf16>
    %276 = vector.shape_cast %254 : vector<1x256xi1> to vector<1x256xi1>
    %277 = vector.broadcast %276 : vector<1x256xi1> to vector<20x256xi1>
    %278 = arith.select %277, %274, %275 : vector<20x256xi1>, vector<20x256xbf16>
    %279 = vector.extract_strided_slice %256 {offsets = [0, 32], sizes = [20, 256], strides = [1, 1]} : vector<20x290xbf16> to vector<20x256xbf16>
    %cst_104 = arith.constant 0.000000e+00 : bf16
    %280 = vector.broadcast %cst_104 : bf16 to vector<20x256xbf16>
    %281 = vector.shape_cast %252 : vector<1x256xi1> to vector<1x256xi1>
    %282 = vector.broadcast %281 : vector<1x256xi1> to vector<20x256xi1>
    %283 = arith.select %282, %279, %280 : vector<20x256xi1>, vector<20x256xbf16>
    %284 = vector.extract_strided_slice %256 {offsets = [0, 33], sizes = [20, 256], strides = [1, 1]} : vector<20x290xbf16> to vector<20x256xbf16>
    %285 = vector.extract_strided_slice %256 {offsets = [0, 34], sizes = [20, 256], strides = [1, 1]} : vector<20x290xbf16> to vector<20x256xbf16>
    %cst_105 = arith.constant 0.000000e+00 : bf16
    %286 = vector.broadcast %cst_105 : bf16 to vector<20x256xbf16>
    %287 = vector.shape_cast %254 : vector<1x256xi1> to vector<1x256xi1>
    %288 = vector.broadcast %287 : vector<1x256xi1> to vector<20x256xi1>
    %289 = arith.select %288, %285, %286 : vector<20x256xi1>, vector<20x256xbf16>
    %290 = tpu.concatenate %261, %262, %267, %272, %273, %278, %283, %284, %289 in 0 : vector<20x256xbf16>, vector<20x256xbf16>, vector<20x256xbf16>, vector<20x256xbf16>, vector<20x256xbf16>, vector<20x256xbf16>, vector<20x256xbf16>, vector<20x256xbf16>, vector<20x256xbf16> -> vector<180x256xbf16>
    %c0_106 = arith.constant 0 : index
    %c0_107 = arith.constant 0 : index
    %291 = vector.load %arg6[%c0_106, %c0_107] : memref<4x180xbf16, #tpu.memory_space<vmem>>, vector<4x180xbf16>
    %cst_108 = arith.constant dense<0.000000e+00> : vector<4x256xf32>
    %292 = tpu.matmul %291, %290, %cst_108 {dimension_numbers = #tpu.dot_dimension_numbers<[1], [0], [0], [1], [0, 0, 1, 1], [], []>} : vector<4x180xbf16>, vector<180x256xbf16>, vector<4x256xf32> -> vector<4x256xf32>
    %c0_109 = arith.constant 0 : index
    %c0_110 = arith.constant 0 : index
    %293 = vector.load %arg7[%c0_109, %c0_110] : memref<4x1xf32, #tpu.memory_space<vmem>>, vector<4x1xf32>
    %294 = vector.broadcast %293 : vector<4x1xf32> to vector<4x256xf32>
    %295 = arith.addf %292, %294 : vector<4x256xf32>
    %c0_111 = arith.constant 0 : index
    %c0_112 = arith.constant 0 : index
    %c0_113 = arith.constant 0 : index
    %296 = vector.load %arg8[%c0_111, %c0_112, %c0_113] : memref<1x4x256xf32, #tpu.memory_space<vmem>>, vector<1x4x256xf32>
    %297 = vector.shape_cast %296 : vector<1x4x256xf32> to vector<4x256xf32>
    %298 = vector.shape_cast %295 : vector<4x256xf32> to vector<1x4x256xf32>
    tpu.vector_store %arg8[%c0_111, %c0_112, %c0_113], %298 {strides = array<i32>} : memref<1x4x256xf32, #tpu.memory_space<vmem>>, vector<1x4x256xf32>,
    %cst_114 = arith.constant dense<0.000000e+00> : vector<4xf32>
    %299 = vector.multi_reduction <add>, %295, %cst_114 [1] : vector<4x256xf32> to vector<4xf32>
    %300 = vector.shape_cast %299 : vector<4xf32> to vector<4x1xf32>
    %c0_115 = arith.constant 0 : index
    %c0_116 = arith.constant 0 : index
    %c0_117 = arith.constant 0 : index
    %301 = vector.load %arg9[%c0_115, %c0_116, %c0_117] : memref<1x4x1xf32, #tpu.memory_space<vmem>>, vector<1x4x1xf32>
    %302 = vector.shape_cast %301 : vector<1x4x1xf32> to vector<4x1xf32>
    %303 = vector.shape_cast %300 : vector<4x1xf32> to vector<1x4x1xf32>
    tpu.vector_store %arg9[%c0_115, %c0_116, %c0_117], %303 {strides = array<i32>} : memref<1x4x1xf32, #tpu.memory_space<vmem>>, vector<1x4x1xf32>,
    %304 = arith.mulf %295, %295 : vector<4x256xf32>
    %cst_118 = arith.constant dense<0.000000e+00> : vector<4xf32>
    %305 = vector.multi_reduction <add>, %304, %cst_118 [1] : vector<4x256xf32> to vector<4xf32>
    %306 = vector.shape_cast %305 : vector<4xf32> to vector<4x1xf32>
    %c0_119 = arith.constant 0 : index
    %c0_120 = arith.constant 0 : index
    %c0_121 = arith.constant 0 : index
    %307 = vector.load %arg10[%c0_119, %c0_120, %c0_121] : memref<1x4x1xf32, #tpu.memory_space<vmem>>, vector<1x4x1xf32>
    %308 = vector.shape_cast %307 : vector<1x4x1xf32> to vector<4x1xf32>
    %309 = vector.shape_cast %306 : vector<4x1xf32> to vector<1x4x1xf32>
    tpu.vector_store %arg10[%c0_119, %c0_120, %c0_121], %309 {strides = array<i32>} : memref<1x4x1xf32, #tpu.memory_space<vmem>>, vector<1x4x1xf32>,
    return
  }
  func.func @transform_0(%arg0: i32) -> (i32, i32, i32, i32) {
    %c0_i32 = arith.constant 0 : i32
    %c0_i32_0 = arith.constant 0 : i32
    %c0_i32_1 = arith.constant 0 : i32
    %c0_i32_2 = arith.constant 0 : i32
    return %arg0, %c0_i32, %c0_i32_0, %c0_i32_1 : i32, i32, i32, i32
  }
  func.func @transform_1(%arg0: i32) -> (i32, i32, i32) {
    %c0_i32 = arith.constant 0 : i32
    %c0_i32_0 = arith.constant 0 : i32
    %c0_i32_1 = arith.constant 0 : i32
    return %arg0, %c0_i32, %c0_i32_0 : i32, i32, i32
  }
  func.func @transform_2(%arg0: i32) -> (i32, i32, i32) {
    %c0_i32 = arith.constant 0 : i32
    %c0_i32_0 = arith.constant 0 : i32
    %c0_i32_1 = arith.constant 0 : i32
    %c0_i32_2 = arith.constant 0 : i32
    return %c0_i32, %c0_i32_0, %c0_i32_1 : i32, i32, i32
  }
  func.func @transform_3(%arg0: i32) -> (i32, i32, i32) {
    %c0_i32 = arith.constant 0 : i32
    %c0_i32_0 = arith.constant 0 : i32
    %c0_i32_1 = arith.constant 0 : i32
    %c0_i32_2 = arith.constant 0 : i32
    return %c0_i32, %c0_i32_0, %c0_i32_1 : i32, i32, i32
  }
  func.func @transform_4(%arg0: i32) -> (i32, i32) {
    %c0_i32 = arith.constant 0 : i32
    %c0_i32_0 = arith.constant 0 : i32
    %c0_i32_1 = arith.constant 0 : i32
    return %c0_i32, %c0_i32_0 : i32, i32
  }
  func.func @transform_5(%arg0: i32) -> (i32, i32) {
    %c0_i32 = arith.constant 0 : i32
    %c0_i32_0 = arith.constant 0 : i32
    %c0_i32_1 = arith.constant 0 : i32
    return %c0_i32, %c0_i32_0 : i32, i32
  }
  func.func @transform_6(%arg0: i32) -> (i32, i32) {
    %c0_i32 = arith.constant 0 : i32
    %c0_i32_0 = arith.constant 0 : i32
    %c0_i32_1 = arith.constant 0 : i32
    return %c0_i32, %c0_i32_0 : i32, i32
  }
  func.func @transform_7(%arg0: i32) -> (i32, i32, i32) {
    %c0_i32 = arith.constant 0 : i32
    %c0_i32_0 = arith.constant 0 : i32
    %c0_i32_1 = arith.constant 0 : i32
    return %arg0, %c0_i32, %c0_i32_0 : i32, i32, i32
  }
  func.func @transform_8(%arg0: i32) -> (i32, i32, i32) {
    %c0_i32 = arith.constant 0 : i32
    %c0_i32_0 = arith.constant 0 : i32
    %c0_i32_1 = arith.constant 0 : i32
    return %arg0, %c0_i32, %c0_i32_0 : i32, i32, i32
  }
  func.func @transform_9(%arg0: i32) -> (i32, i32, i32) {
    %c0_i32 = arith.constant 0 : i32
    %c0_i32_0 = arith.constant 0 : i32
    %c0_i32_1 = arith.constant 0 : i32
    return %arg0, %c0_i32, %c0_i32_0 : i32, i32, i32
  }
}

</mosaic_0001>

<llo_original>
// kernel: tpu_custom_call.1
$region0: #{tpu_custom_call.1}
  #allocation0 [shape = 'u32[]', space=smem, size = 0x4, offset = 0x4, fixed_abs, tag = 'smem constant byte address 0x4 - core index']
  #allocation1 [shape = 'u32[144,128]{1,0:T(1,128)}', space=vmem, size = 0x12000, scoped, tag = 'internal scratch']
  %s0 = inlined_call_operand.hbm [shape: f32[2,4,16,16], index: 0, kind: input, shape index: {}]
  %s1 = inlined_call_operand.vmem [shape: f32[2,4,256], index: 1, kind: input, shape index: {}]
  %s2 = inlined_call_operand.vmem [shape: bf16[4,4,4], index: 2, kind: input, shape index: {}]
  %s3 = inlined_call_operand.vmem [shape: f32[4,4,1], index: 3, kind: input, shape index: {}]
  %s4 = inlined_call_operand.hbm [shape: bf16[50,256], index: 4, kind: input, shape index: {}]
  %s5 = inlined_call_operand.vmem [shape: bf16[4,180], index: 5, kind: input, shape index: {}]
  %s6 = inlined_call_operand.vmem [shape: f32[4,1], index: 6, kind: input, shape index: {}]
  %s7 = inlined_call_operand.hbm [shape: f32[2,4,256], index: 7, kind: output, shape index: {0}]
  %s8 = inlined_call_operand.vmem [shape: f32[2,4,1], index: 8, kind: output, shape index: {1}]
  %s9 = inlined_call_operand.vmem [shape: f32[2,4,1], index: 9, kind: output, shape index: {2}]
  %10 = xla_tuple %s7, %s8, %s9
  %s11 = sld [smem:[#allocation0]]
  $region85: #{tpu_custom_call.1} parent=0
    _
  %s13 = ssub.s32 1, %s11
  %s14 = scalar_select 0, %s13, %s11
  $region1: #{tpu_custom_call.1} parent=0
    #allocation2 [shape = 'u8[65536]{0}', space=vmem, size = 0x10000, scoped, tag = 'input window, operand 0']
    #allocation3 [shape = 's32[2]{0}', space=sflag, size = 0x8, scoped, tag = 'scoped memory for tpu_custom_call.1']
    #allocation4 [shape = 's32[2]{0}', space=sflag, size = 0x8, scoped, tag = 'scoped memory for tpu_custom_call.1']
    #allocation5 [shape = 'u8[28672]{0}', space=vmem, size = 0x7000, scoped, tag = 'input window, operand 4, single buffered']
    #allocation6 [shape = 's32[1]{0}', space=sflag, size = 0x4, scoped, tag = 'scoped memory for tpu_custom_call.1']
    #allocation7 [shape = 'u8[8192]{0}', space=vmem, size = 0x2000, scoped, tag = 'output window, operand 0']
    %15 = vsyncpa [#allocation3], 0
    %s16 = scalar_lea.sflag [#allocation3], 1
    %17 = vsyncpa %s16, 0
    %18 = vsyncpa [#allocation6], 0
    %19 = vsyncpa [#allocation4], 0
    %s20 = scalar_lea.sflag [#allocation4], 1
    %21 = vsyncpa %s20, 0
    loop: start=0, step=1, limit=4
    $region2: #{tpu_custom_call.1} parent=1 // loop_pre_header
      _
    $region3: #{tpu_custom_call.1} parent=1 // loop_header
      %s23 = sphi 0, %s27
      %p24 = scmp.ge.s32.totalorder %s23, 4
      %s33 = sphi 0, %s35
      %s36 = sphi 0, %s33
      %s37 = sphi 0, %s36
      %s53 = sphi 0, %s37
      %s59 = sphi 0, %s61
      %s62 = sphi 0, %s59
      %s63 = sphi 0, %s62
      %s79 = sphi 0, %s63
      %s83 = sphi 0, %s83
      %s85 = sphi 0, %s83
      %s86 = sphi 0, %s85
      %s100 = sphi 0, %s86
      %s104 = sphi 0, %s104
      %s106 = sphi 0, %s104
      %s107 = sphi 0, %s106
      %s121 = sphi 0, %s107
      %s125 = sphi 0, %s125
      %s127 = sphi 0, %s125
      %s128 = sphi 0, %s127
      %s142 = sphi 0, %s128
      %s146 = sphi 0, %s146
      %s148 = sphi 0, %s146
      %s149 = sphi 0, %s148
      %s163 = sphi 0, %s149
      %s167 = sphi 0, %s167
      %s169 = sphi 0, %s167
      %s170 = sphi 0, %s169
      %s184 = sphi 0, %s170
      %s190 = sphi 0, %s192
      %s193 = sphi 0, %s190
      %s194 = sphi 0, %s193
      %s210 = sphi 0, %s194
      %s216 = sphi 0, %s218
      %s219 = sphi 0, %s216
      %s220 = sphi 0, %s219
      %s236 = sphi 0, %s220
      %s242 = sphi 0, %s244
      %s245 = sphi 0, %s242
      %s246 = sphi 0, %s245
      %s262 = sphi 0, %s246
    $region4: #{tpu_custom_call.1} parent=1 // loop_header_branch
      %26 = sbr.rel (%p24) target = $region8
    $region5: #{tpu_custom_call.1} parent=1 // loop_body
      %s28 = ssub.s32 %s23, 1
      %s29 = ssub.s32 %s23, 2
      %s30 = sadd.s32 %s23, 1
      %s31 = ssub.s32 %s23, %s30
      %p32 = scmp.eq.s32.totalorder %s31, 0
      %s34 = sadd.s32 %s33, 1
      %s35 = scalar_select %p32, %s33, %s34
      %p38 = pneg %p32
      %p39 = scmp.eq.s32.totalorder %s23, 1
      %p40 = por %p38, %p39
      %p41 = scmp.ne.s32.totalorder %s33, %s36
      %p42 = scmp.eq.s32.totalorder %s23, 0
      %p43 = por %p41, %p42
      %p44 = scmp.ne.s32.totalorder %s33, %s36
      %p45 = scmp.eq.s32.totalorder %s28, 1
      %p46 = por %p44, %p45
      %p47 = scmp.ne.s32.totalorder %s36, %s37
      %p48 = scmp.eq.s32.totalorder %s28, 0
      %p49 = por %p47, %p48
      %p50 = scmp.ne.s32.totalorder %s36, %s37
      %p51 = scmp.eq.s32.totalorder %s29, 1
      %p52 = por %p50, %p51
      %p54 = scmp.ne.s32.totalorder %s37, %s53
      %p55 = scmp.eq.s32.totalorder %s29, 0
      %p56 = por %p54, %p55
      %s57 = ssub.s32 %s23, %s30
      %p58 = scmp.eq.s32.totalorder %s57, 0
      %s60 = sadd.s32 %s59, 1
      %s61 = scalar_select %p58, %s59, %s60
      %p64 = pneg %p58
      %p65 = scmp.eq.s32.totalorder %s23, 1
      %p66 = por %p64, %p65
      %p67 = scmp.ne.s32.totalorder %s59, %s62
      %p68 = scmp.eq.s32.totalorder %s23, 0
      %p69 = por %p67, %p68
      %p70 = scmp.ne.s32.totalorder %s59, %s62
      %p71 = scmp.eq.s32.totalorder %s28, 1
      %p72 = por %p70, %p71
      %p73 = scmp.ne.s32.totalorder %s62, %s63
      %p74 = scmp.eq.s32.totalorder %s28, 0
      %p75 = por %p73, %p74
      %p76 = scmp.ne.s32.totalorder %s62, %s63
      %p77 = scmp.eq.s32.totalorder %s29, 1
      %p78 = por %p76, %p77
      %p80 = scmp.ne.s32.totalorder %s63, %s79
      %p81 = scmp.eq.s32.totalorder %s29, 0
      %p82 = por %p80, %p81
      %s84 = sadd.s32 %s83, 1
      %p87 = scmp.eq.s32.totalorder %s23, 1
      %p88 = scmp.ne.s32.totalorder %s83, %s85
      %p89 = scmp.eq.s32.totalorder %s23, 0
      %p90 = por %p88, %p89
      %p91 = scmp.ne.s32.totalorder %s83, %s85
      %p92 = scmp.eq.s32.totalorder %s28, 1
      %p93 = por %p91, %p92
      %p94 = scmp.ne.s32.totalorder %s85, %s86
      %p95 = scmp.eq.s32.totalorder %s28, 0
      %p96 = por %p94, %p95
      %p97 = scmp.ne.s32.totalorder %s85, %s86
      %p98 = scmp.eq.s32.totalorder %s29, 1
      %p99 = por %p97, %p98
      %p101 = scmp.ne.s32.totalorder %s86, %s100
      %p102 = scmp.eq.s32.totalorder %s29, 0
      %p103 = por %p101, %p102
      %s105 = sadd.s32 %s104, 1
      %p108 = scmp.eq.s32.totalorder %s23, 1
      %p109 = scmp.ne.s32.totalorder %s104, %s106
      %p110 = scmp.eq.s32.totalorder %s23, 0
      %p111 = por %p109, %p110
      %p112 = scmp.ne.s32.totalorder %s104, %s106
      %p113 = scmp.eq.s32.totalorder %s28, 1
      %p114 = por %p112, %p113
      %p115 = scmp.ne.s32.totalorder %s106, %s107
      %p116 = scmp.eq.s32.totalorder %s28, 0
      %p117 = por %p115, %p116
      %p118 = scmp.ne.s32.totalorder %s106, %s107
      %p119 = scmp.eq.s32.totalorder %s29, 1
      %p120 = por %p118, %p119
      %p122 = scmp.ne.s32.totalorder %s107, %s121
      %p123 = scmp.eq.s32.totalorder %s29, 0
      %p124 = por %p122, %p123
      %s126 = sadd.s32 %s125, 1
      %p129 = scmp.eq.s32.totalorder %s23, 1
      %p130 = scmp.ne.s32.totalorder %s125, %s127
      %p131 = scmp.eq.s32.totalorder %s23, 0
      %p132 = por %p130, %p131
      %p133 = scmp.ne.s32.totalorder %s125, %s127
      %p134 = scmp.eq.s32.totalorder %s28, 1
      %p135 = por %p133, %p134
      %p136 = scmp.ne.s32.totalorder %s127, %s128
      %p137 = scmp.eq.s32.totalorder %s28, 0
      %p138 = por %p136, %p137
      %p139 = scmp.ne.s32.totalorder %s127, %s128
      %p140 = scmp.eq.s32.totalorder %s29, 1
      %p141 = por %p139, %p140
      %p143 = scmp.ne.s32.totalorder %s128, %s142
      %p144 = scmp.eq.s32.totalorder %s29, 0
      %p145 = por %p143, %p144
      %s147 = sadd.s32 %s146, 1
      %p150 = scmp.eq.s32.totalorder %s23, 1
      %p151 = scmp.ne.s32.totalorder %s146, %s148
      %p152 = scmp.eq.s32.totalorder %s23, 0
      %p153 = por %p151, %p152
      %p154 = scmp.ne.s32.totalorder %s146, %s148
      %p155 = scmp.eq.s32.totalorder %s28, 1
      %p156 = por %p154, %p155
      %p157 = scmp.ne.s32.totalorder %s148, %s149
      %p158 = scmp.eq.s32.totalorder %s28, 0
      %p159 = por %p157, %p158
      %p160 = scmp.ne.s32.totalorder %s148, %s149
      %p161 = scmp.eq.s32.totalorder %s29, 1
      %p162 = por %p160, %p161
      %p164 = scmp.ne.s32.totalorder %s149, %s163
      %p165 = scmp.eq.s32.totalorder %s29, 0
      %p166 = por %p164, %p165
      %s168 = sadd.s32 %s167, 1
      %p171 = scmp.eq.s32.totalorder %s23, 1
      %p172 = scmp.ne.s32.totalorder %s167, %s169
      %p173 = scmp.eq.s32.totalorder %s23, 0
      %p174 = por %p172, %p173
      %p175 = scmp.ne.s32.totalorder %s167, %s169
      %p176 = scmp.eq.s32.totalorder %s28, 1
      %p177 = por %p175, %p176
      %p178 = scmp.ne.s32.totalorder %s169, %s170
      %p179 = scmp.eq.s32.totalorder %s28, 0
      %p180 = por %p178, %p179
      %p181 = scmp.ne.s32.totalorder %s169, %s170
      %p182 = scmp.eq.s32.totalorder %s29, 1
      %p183 = por %p181, %p182
      %p185 = scmp.ne.s32.totalorder %s170, %s184
      %p186 = scmp.eq.s32.totalorder %s29, 0
      %p187 = por %p185, %p186
      %s188 = ssub.s32 %s23, %s30
      %p189 = scmp.eq.s32.totalorder %s188, 0
      %s191 = sadd.s32 %s190, 1
      %s192 = scalar_select %p189, %s190, %s191
      %p195 = pneg %p189
      %p196 = scmp.eq.s32.totalorder %s23, 1
      %p197 = por %p195, %p196
      %p198 = scmp.ne.s32.totalorder %s190, %s193
      %p199 = scmp.eq.s32.totalorder %s23, 0
      %p200 = por %p198, %p199
      %p201 = scmp.ne.s32.totalorder %s190, %s193
      %p202 = scmp.eq.s32.totalorder %s28, 1
      %p203 = por %p201, %p202
      %p204 = scmp.ne.s32.totalorder %s193, %s194
      %p205 = scmp.eq.s32.totalorder %s28, 0
      %p206 = por %p204, %p205
      %p207 = scmp.ne.s32.totalorder %s193, %s194
      %p208 = scmp.eq.s32.totalorder %s29, 1
      %p209 = por %p207, %p208
      %p211 = scmp.ne.s32.totalorder %s194, %s210
      %p212 = scmp.eq.s32.totalorder %s29, 0
      %p213 = por %p211, %p212
      %s214 = ssub.s32 %s23, %s30
      %p215 = scmp.eq.s32.totalorder %s214, 0
      %s217 = sadd.s32 %s216, 1
      %s218 = scalar_select %p215, %s216, %s217
      %p221 = pneg %p215
      %p222 = scmp.eq.s32.totalorder %s23, 1
      %p223 = por %p221, %p222
      %p224 = scmp.ne.s32.totalorder %s216, %s219
      %p225 = scmp.eq.s32.totalorder %s23, 0
      %p226 = por %p224, %p225
      %p227 = scmp.ne.s32.totalorder %s216, %s219
      %p228 = scmp.eq.s32.totalorder %s28, 1
      %p229 = por %p227, %p228
      %p230 = scmp.ne.s32.totalorder %s219, %s220
      %p231 = scmp.eq.s32.totalorder %s28, 0
      %p232 = por %p230, %p231
      %p233 = scmp.ne.s32.totalorder %s219, %s220
      %p234 = scmp.eq.s32.totalorder %s29, 1
      %p235 = por %p233, %p234
      %p237 = scmp.ne.s32.totalorder %s220, %s236
      %p238 = scmp.eq.s32.totalorder %s29, 0
      %p239 = por %p237, %p238
      %s240 = ssub.s32 %s23, %s30
      %p241 = scmp.eq.s32.totalorder %s240, 0
      %s243 = sadd.s32 %s242, 1
      %s244 = scalar_select %p241, %s242, %s243
      %p247 = pneg %p241
      %p248 = scmp.eq.s32.totalorder %s23, 1
      %p249 = por %p247, %p248
      %p250 = scmp.ne.s32.totalorder %s242, %s245
      %p251 = scmp.eq.s32.totalorder %s23, 0
      %p252 = por %p250, %p251
      %p253 = scmp.ne.s32.totalorder %s242, %s245
      %p254 = scmp.eq.s32.totalorder %s28, 1
      %p255 = por %p253, %p254
      %p256 = scmp.ne.s32.totalorder %s245, %s246
      %p257 = scmp.eq.s32.totalorder %s28, 0
      %p258 = por %p256, %p257
      %p259 = scmp.ne.s32.totalorder %s245, %s246
      %p260 = scmp.eq.s32.totalorder %s29, 1
      %p261 = por %p259, %p260
      %p263 = scmp.ne.s32.totalorder %s246, %s262
      %p264 = scmp.eq.s32.totalorder %s29, 0
      %p265 = por %p263, %p264
      %p266 = scmp.le.s32.totalorder 1, %s23
      %p267 = scmp.lt.s32.totalorder %s23, 3
      %p268 = pnand %p266, %p267
      %p269 = pneg %p268
      // Predicated region
      $region9: #{tpu_custom_call.1} parent=5 // pred_check
        _
      $region10: #{tpu_custom_call.1} parent=5 // pred_check_branch
        %271 = sbr.rel (%p268) target = $region12
      $region11: #{tpu_custom_call.1} parent=5 // pred_region
        %s272 = ssub.s32 %s23, 1
        // Predicated region
        $region13: #{tpu_custom_call.1} parent=11 // pred_check
          %p273 = pneg %p96
        $region14: #{tpu_custom_call.1} parent=11 // pred_check_branch
          %275 = sbr.rel (%p273) target = $region16
        $region15: #{tpu_custom_call.1} parent=11 // pred_region
          _
        $region16: #{tpu_custom_call.1} parent=11 // pred_fallthru
          _
        // Predicated region
        $region17: #{tpu_custom_call.1} parent=11 // pred_check
          %p276 = pneg %p117
        $region18: #{tpu_custom_call.1} parent=11 // pred_check_branch
          %278 = sbr.rel (%p276) target = $region20
        $region19: #{tpu_custom_call.1} parent=11 // pred_region
          _
        $region20: #{tpu_custom_call.1} parent=11 // pred_fallthru
          _
        // Predicated region
        $region21: #{tpu_custom_call.1} parent=11 // pred_check
          %p279 = pneg %p138
        $region22: #{tpu_custom_call.1} parent=11 // pred_check_branch
          %281 = sbr.rel (%p279) target = $region24
        $region23: #{tpu_custom_call.1} parent=11 // pred_region
          %s283 = ssub.s32 896, 896
          %284 = vsyncadd [#allocation6], %s283
          %s285 = sshll.u32 [#allocation5], 4
          %s286 = int_to_ptr.vmem [resolvable:$true] %s285
          %291 = dma.hbm_to_vmem [thread:$0]  %s4, 896, %s286, [#allocation6], 128, 128, 8
        $region24: #{tpu_custom_call.1} parent=11 // pred_fallthru
          _
        // Predicated region
        $region25: #{tpu_custom_call.1} parent=11 // pred_check
          %p292 = pneg %p159
        $region26: #{tpu_custom_call.1} parent=11 // pred_check_branch
          %294 = sbr.rel (%p292) target = $region28
        $region27: #{tpu_custom_call.1} parent=11 // pred_region
          _
        $region28: #{tpu_custom_call.1} parent=11 // pred_fallthru
          _
        // Predicated region
        $region29: #{tpu_custom_call.1} parent=11 // pred_check
          %p295 = pneg %p180
        $region30: #{tpu_custom_call.1} parent=11 // pred_check_branch
          %297 = sbr.rel (%p295) target = $region32
        $region31: #{tpu_custom_call.1} parent=11 // pred_region
          _
        $region32: #{tpu_custom_call.1} parent=11 // pred_fallthru
          _
      $region12: #{tpu_custom_call.1} parent=5 // pred_fallthru
        _
      %p298 = scmp.lt.s32.totalorder %s23, 2
      // Predicated region
      $region33: #{tpu_custom_call.1} parent=5 // pred_check
        %p299 = pneg %p298
      $region34: #{tpu_custom_call.1} parent=5 // pred_check_branch
        %301 = sbr.rel (%p299) target = $region36
      $region35: #{tpu_custom_call.1} parent=5 // pred_region
        // Predicated region
        $region37: #{tpu_custom_call.1} parent=35 // pred_check
          %p302 = pneg %p43
        $region38: #{tpu_custom_call.1} parent=35 // pred_check_branch
          %304 = sbr.rel (%p302) target = $region40
        $region39: #{tpu_custom_call.1} parent=35 // pred_region
          %s305 = sand.u32 %s33, 1
          %s306 = scalar_lea.sflag [#allocation3], %s305
          %s307 = sand.u32 %s33, 1
          %s308 = smul.addr %s307, 64
          %s309 = scalar_lea.vmem [#allocation2], %s308
          %s311 = ssub.s32 1024, 1024
          %312 = vsyncadd %s306, %s311
          %s313 = smul.addr %s23, 8
          %s314 = smul.addr %s313, 128
          %s315 = scalar_lea.hbm %s0, %s314
          %s316 = sshll.u32 %s309, 4
          %s317 = int_to_ptr.vmem [resolvable:$true] %s316
          %322 = dma.hbm_to_vmem [thread:$0]  %s315, 1024, %s317, %s306, 128, 128, 8
        $region40: #{tpu_custom_call.1} parent=35 // pred_fallthru
          _
        // Predicated region
        $region41: #{tpu_custom_call.1} parent=35 // pred_check
          %p323 = pneg %p69
        $region42: #{tpu_custom_call.1} parent=35 // pred_check_branch
          %325 = sbr.rel (%p323) target = $region44
        $region43: #{tpu_custom_call.1} parent=35 // pred_region
          %p326 = scmp.lt.s32.totalorder %s23, 1
          %s327 = scalar_select %p326, %s23, 1
          %s328 = smul.addr %s327, 2
          %s329 = smul.addr %s328, 4
          %s330 = scalar_lea.vmem %s1, %s329
        $region44: #{tpu_custom_call.1} parent=35 // pred_fallthru
          _
      $region36: #{tpu_custom_call.1} parent=5 // pred_fallthru
        _
      %p331 = scmp.le.s32.totalorder 1, %s23
      %p332 = scmp.lt.s32.totalorder %s23, 3
      %p333 = pnand %p331, %p332
      %p334 = pneg %p333
      // Predicated region
      $region45: #{tpu_custom_call.1} parent=5 // pred_check
        _
      $region46: #{tpu_custom_call.1} parent=5 // pred_check_branch
        %336 = sbr.rel (%p333) target = $region48
      $region47: #{tpu_custom_call.1} parent=5 // pred_region
        %s337 = ssub.s32 %s23, 1
        %s338 = sand.u32 %s36, 1
        %s339 = scalar_lea.sflag [#allocation3], %s338
        %s340 = sand.u32 %s36, 1
        %s341 = smul.addr %s340, 64
        %s342 = scalar_lea.vmem [#allocation2], %s341
        // Predicated region
        $region49: #{tpu_custom_call.1} parent=47 // pred_check
          %p343 = pneg %p49
        $region50: #{tpu_custom_call.1} parent=47 // pred_check_branch
          %345 = sbr.rel (%p343) target = $region52
        $region51: #{tpu_custom_call.1} parent=47 // pred_region
          %346 = dma.done %s339, 1024
        $region52: #{tpu_custom_call.1} parent=47 // pred_fallthru
          _
        // Predicated region
        $region53: #{tpu_custom_call.1} parent=47 // pred_check
          %p347 = pneg %p138
        $region54: #{tpu_custom_call.1} parent=47 // pred_check_branch
          %349 = sbr.rel (%p347) target = $region56
        $region55: #{tpu_custom_call.1} parent=47 // pred_region
          %350 = dma.done [#allocation6], 896
        $region56: #{tpu_custom_call.1} parent=47 // pred_fallthru
          _
        %s351 = sand.u32 %s36, 1
        %s352 = scalar_lea.sflag [#allocation3], %s351
        %s353 = sand.u32 %s36, 1
        %s354 = smul.addr %s353, 64
        %s355 = scalar_lea.vmem [#allocation2], %s354
        %p356 = pneg %p49
        %p357 = pneg %p46
        %p358 = scmp.lt.s32.totalorder %s28, 1
        %s359 = scalar_select %p358, %s28, 1
        %s360 = smul.addr %s359, 2
        %s361 = smul.addr %s360, 4
        %s362 = scalar_lea.vmem %s1, %s361
        %p363 = pneg %p75
        %p364 = pneg %p72
        %p365 = pneg %p96
        %p366 = pneg %p93
        %p367 = pneg %p117
        %p368 = pneg %p114
        %p369 = pneg %p138
        %p370 = pneg %p135
        %p371 = pneg %p159
        %p372 = pneg %p156
        %p373 = pneg %p180
        %p374 = pneg %p177
        %p375 = pneg %p206
        %p376 = pneg %p203
        %s377 = sand.u32 %s193, 1
        %s378 = scalar_lea.sflag [#allocation4], %s377
        %s379 = sand.u32 %s193, 1
        %s380 = smul.addr %s379, 8
        %s381 = scalar_lea.vmem [#allocation7], %s380
        %p382 = pneg %p232
        %p383 = pneg %p229
        %p384 = scmp.lt.s32.totalorder %s28, 1
        %s385 = scalar_select %p384, %s28, 1
        %s386 = smul.addr %s385, 4
        %s387 = scalar_lea.vmem %s8, %s386
        %p388 = pneg %p258
        %p389 = pneg %p255
        %p390 = scmp.lt.s32.totalorder %s28, 1
        %s391 = scalar_select %p390, %s28, 1
        %s392 = smul.addr %s391, 4
        %s393 = scalar_lea.vmem %s9, %s392
        %p394 = scmp.lt.s32.totalorder %s28, 1
        %s395 = scalar_select %p394, %s28, 1
        %s396 = smul.addr %s395, 2
        %s397 = smul.addr %s396, 4
        %s398 = scalar_lea.vmem %s1, %s397
        %p399 = scmp.lt.s32.totalorder %s28, 1
        %s400 = scalar_select %p399, %s28, 1
        %s401 = smul.addr %s400, 4
        %s402 = scalar_lea.vmem %s8, %s401
        %p403 = scmp.lt.s32.totalorder %s28, 1
        %s404 = scalar_select %p403, %s28, 1
        %s405 = smul.addr %s404, 4
        %s406 = scalar_lea.vmem %s9, %s405
        %v410 = vld [vmem:[%s342] sm:$0xff]
        %v411 = vld [vmem:[%s342 + $0x8] sm:$0xff]
        %v412 = vld [vmem:[%s342 + $0x10] sm:$0xff]
        %v413 = vld [vmem:[%s342 + $0x18] sm:$0xff]
        %v414 = vld [vmem:[%s342 + $0x20] sm:$0xff]
        %v415 = vld [vmem:[%s342 + $0x28] sm:$0xff]
        %v416 = vld [vmem:[%s342 + $0x30] sm:$0xff]
        %v417 = vld [vmem:[%s342 + $0x38] sm:$0xff]
        %v418 = vld [vmem:[%s398] sm:$0xff]
        %vm419 = vcmask 124928
        %v420 = vsel %vm419, %v410, -inf
        %v421 = vrot.slane %v420, 4
        %v422 = vmax.f32 %v420, %v421
        %v423 = vrot.slane %v422, 2
        %v424 = vmax.f32 %v422, %v423
        %v425 = vrot.slane %v424, 1
        %v426 = vmax.f32 %v424, %v425
        %v427 = vsel %vm419, %v412, -inf
        %v428 = vrot.slane %v427, 4
        %v429 = vmax.f32 %v427, %v428
        %v430 = vrot.slane %v429, 2
        %v431 = vmax.f32 %v429, %v430
        %v432 = vrot.slane %v431, 1
        %v433 = vmax.f32 %v431, %v432
        %v434 = vsel %vm419, %v414, -inf
        %v435 = vrot.slane %v434, 4
        %v436 = vmax.f32 %v434, %v435
        %v437 = vrot.slane %v436, 2
        %v438 = vmax.f32 %v436, %v437
        %v439 = vrot.slane %v438, 1
        %v440 = vmax.f32 %v438, %v439
        %v441 = vsel %vm419, %v416, -inf
        %v442 = vrot.slane %v441, 4
        %v443 = vmax.f32 %v441, %v442
        %v444 = vrot.slane %v443, 2
        %v445 = vmax.f32 %v443, %v444
        %v446 = vrot.slane %v445, 1
        %v447 = vmax.f32 %v445, %v446
        %vm448 = vcmask 128002
        %v449 = vsel %vm448, %v410, -inf
        %v450 = vrot.slane %v449, 4
        %v451 = vmax.f32 %v449, %v450
        %v452 = vrot.slane %v451, 2
        %v453 = vmax.f32 %v451, %v452
        %v454 = vrot.slane %v453, 1
        %v455 = vmax.f32 %v453, %v454
        %v456 = vsel %vm448, %v412, -inf
        %v457 = vrot.slane %v456, 4
        %v458 = vmax.f32 %v456, %v457
        %v459 = vrot.slane %v458, 2
        %v460 = vmax.f32 %v458, %v459
        %v461 = vrot.slane %v460, 1
        %v462 = vmax.f32 %v460, %v461
        %v463 = vsel %vm448, %v414, -inf
        %v464 = vrot.slane %v463, 4
        %v465 = vmax.f32 %v463, %v464
        %v466 = vrot.slane %v465, 2
        %v467 = vmax.f32 %v465, %v466
        %v468 = vrot.slane %v467, 1
        %v469 = vmax.f32 %v467, %v468
        %v470 = vsel %vm448, %v416, -inf
        %v471 = vrot.slane %v470, 4
        %v472 = vmax.f32 %v470, %v471
        %v473 = vrot.slane %v472, 2
        %v474 = vmax.f32 %v472, %v473
        %v475 = vrot.slane %v474, 1
        %v476 = vmax.f32 %v474, %v475
        %vm477 = vcmask 130053
        %v478 = vsel %vm477, %v410, -inf
        %v479 = vrot.slane %v478, 4
        %v480 = vmax.f32 %v478, %v479
        %v481 = vrot.slane %v480, 2
        %v482 = vmax.f32 %v480, %v481
        %v483 = vrot.slane %v482, 1
        %v484 = vmax.f32 %v482, %v483
        %v485 = vsel %vm477, %v412, -inf
        %v486 = vrot.slane %v485, 4
        %v487 = vmax.f32 %v485, %v486
        %v488 = vrot.slane %v487, 2
        %v489 = vmax.f32 %v487, %v488
        %v490 = vrot.slane %v489, 1
        %v491 = vmax.f32 %v489, %v490
        %v492 = vsel %vm477, %v414, -inf
        %v493 = vrot.slane %v492, 4
        %v494 = vmax.f32 %v492, %v493
        %v495 = vrot.slane %v494, 2
        %v496 = vmax.f32 %v494, %v495
        %v497 = vrot.slane %v496, 1
        %v498 = vmax.f32 %v496, %v497
        %v499 = vsel %vm477, %v416, -inf
        %v500 = vrot.slane %v499, 4
        %v501 = vmax.f32 %v499, %v500
        %v502 = vrot.slane %v501, 2
        %v503 = vmax.f32 %v501, %v502
        %v504 = vrot.slane %v503, 1
        %v505 = vmax.f32 %v503, %v504
        %v506 = vsel %vm419, %v411, -inf
        %v507 = vrot.slane %v506, 4
        %v508 = vmax.f32 %v506, %v507
        %v509 = vrot.slane %v508, 2
        %v510 = vmax.f32 %v508, %v509
        %v511 = vrot.slane %v510, 1
        %v512 = vmax.f32 %v510, %v511
        %v513 = vsel %vm419, %v413, -inf
        %v514 = vrot.slane %v513, 4
        %v515 = vmax.f32 %v513, %v514
        %v516 = vrot.slane %v515, 2
        %v517 = vmax.f32 %v515, %v516
        %v518 = vrot.slane %v517, 1
        %v519 = vmax.f32 %v517, %v518
        %v520 = vsel %vm419, %v415, -inf
        %v521 = vrot.slane %v520, 4
        %v522 = vmax.f32 %v520, %v521
        %v523 = vrot.slane %v522, 2
        %v524 = vmax.f32 %v522, %v523
        %v525 = vrot.slane %v524, 1
        %v526 = vmax.f32 %v524, %v525
        %v527 = vsel %vm419, %v417, -inf
        %v528 = vrot.slane %v527, 4
        %v529 = vmax.f32 %v527, %v528
        %v530 = vrot.slane %v529, 2
        %v531 = vmax.f32 %v529, %v530
        %v532 = vrot.slane %v531, 1
        %v533 = vmax.f32 %v531, %v532
        %v534 = vsel %vm448, %v411, -inf
        %v535 = vrot.slane %v534, 4
        %v536 = vmax.f32 %v534, %v535
        %v537 = vrot.slane %v536, 2
        %v538 = vmax.f32 %v536, %v537
        %v539 = vrot.slane %v538, 1
        %v540 = vmax.f32 %v538, %v539
        %v541 = vsel %vm448, %v413, -inf
        %v542 = vrot.slane %v541, 4
        %v543 = vmax.f32 %v541, %v542
        %v544 = vrot.slane %v543, 2
        %v545 = vmax.f32 %v543, %v544
        %v546 = vrot.slane %v545, 1
        %v547 = vmax.f32 %v545, %v546
        %v548 = vsel %vm448, %v415, -inf
        %v549 = vrot.slane %v548, 4
        %v550 = vmax.f32 %v548, %v549
        %v551 = vrot.slane %v550, 2
        %v552 = vmax.f32 %v550, %v551
        %v553 = vrot.slane %v552, 1
        %v554 = vmax.f32 %v552, %v553
        %v555 = vsel %vm448, %v417, -inf
        %v556 = vrot.slane %v555, 4
        %v557 = vmax.f32 %v555, %v556
        %v558 = vrot.slane %v557, 2
        %v559 = vmax.f32 %v557, %v558
        %v560 = vrot.slane %v559, 1
        %v561 = vmax.f32 %v559, %v560
        %v562 = vsel %vm477, %v411, -inf
        %v563 = vrot.slane %v562, 4
        %v564 = vmax.f32 %v562, %v563
        %v565 = vrot.slane %v564, 2
        %v566 = vmax.f32 %v564, %v565
        %v567 = vrot.slane %v566, 1
        %v568 = vmax.f32 %v566, %v567
        %v569 = vsel %vm477, %v413, -inf
        %v570 = vrot.slane %v569, 4
        %v571 = vmax.f32 %v569, %v570
        %v572 = vrot.slane %v571, 2
        %v573 = vmax.f32 %v571, %v572
        %v574 = vrot.slane %v573, 1
        %v575 = vmax.f32 %v573, %v574
        %v576 = vsel %vm477, %v415, -inf
        %v577 = vrot.slane %v576, 4
        %v578 = vmax.f32 %v576, %v577
        %v579 = vrot.slane %v578, 2
        %v580 = vmax.f32 %v578, %v579
        %v581 = vrot.slane %v580, 1
        %v582 = vmax.f32 %v580, %v581
        %v583 = vsel %vm477, %v417, -inf
        %v584 = vrot.slane %v583, 4
        %v585 = vmax.f32 %v583, %v584
        %v586 = vrot.slane %v585, 2
        %v587 = vmax.f32 %v585, %v586
        %v588 = vrot.slane %v587, 1
        %v589 = vmax.f32 %v587, %v588
        %v590 = vmax.f32 %v426, %v455
        %v591 = vmax.f32 %v433, %v462
        %v592 = vmax.f32 %v440, %v469
        %v593 = vmax.f32 %v447, %v476
        %v594 = vmax.f32 %v590, %v484
        %v595 = vmax.f32 %v591, %v491
        %v596 = vmax.f32 %v592, %v498
        %v597 = vmax.f32 %v593, %v505
        %v598 = vmax.f32 %v594, %v512
        %v599 = vmax.f32 %v595, %v519
        %v600 = vmax.f32 %v596, %v526
        %v601 = vmax.f32 %v597, %v533
        %v602 = vmax.f32 %v598, %v540
        %v603 = vmax.f32 %v599, %v547
        %v604 = vmax.f32 %v600, %v554
        %v605 = vmax.f32 %v601, %v561
        %v606 = vmax.f32 %v602, %v568
        %v607 = vmax.f32 %v603, %v575
        %v608 = vmax.f32 %v604, %v582
        %v609 = vmax.f32 %v605, %v589
        %vm614 = vcmask 1041409
        %v615 = vsel %vm614, %v607, %v606
        %vm616 = vcmask 1042434
        %v617 = vsel %vm616, %v608, %v615
        %vm618 = vcmask 1043459
        %v619 = vsel %vm618, %v609, %v617
        %vm621 = vcmask 125952
        %v622 = vsel %vm621, %v619, -inf
        %623 = vmax.xlane.f32.xlu0 %v622
        %v624 = vpop.xlane.xlu0 %623
        %v625 = vld [vmem:[%s2] sm:$0x3]
        %v626 = vpack.c.bf16 %v624, %v624
        %v627 = vld [vmem:[%s3] sm:$0xf]
        %vm628 = vcmask 31744
        %v630 = vsel %vm628, %v625, 0
        %vm632 = vcmask 1041408
        %v634 = vsel %vm632, %v626, 0
        %636 = vmatprep.subr.bf16.mxu0 0
        %637 = vmatpush1.bf16.msra.mxu0 %v634
        %638 = vmatprep.subr.bf16.mxu0 0
        %639 = vmatpush1.bf16.msra.mxu0 0
        %640 = vmatprep.subr.bf16.mxu0 0
        %641 = vmatpush1.bf16.msra.mxu0 0
        %642 = vmatprep.subr.bf16.mxu0 0
        %643 = vmatpush1.bf16.msra.mxu0 0
        %644 = vmatprep.subr.bf16.mxu0 0
        %645 = vmatpush1.bf16.msra.mxu0 0
        %646 = vmatprep.subr.bf16.mxu0 0
        %647 = vmatpush1.bf16.msra.mxu0 0
        %648 = vmatprep.subr.bf16.mxu0 0
        %649 = vmatpush1.bf16.msra.mxu0 0
        %650 = vmatprep.subr.bf16.mxu0 0
        %651 = vmatpush1.bf16.msra.mxu0 0
        %652 = vmatprep.subr.bf16.mxu0 0
        %653 = vmatpush1.bf16.msra.mxu0 0
        %654 = vmatprep.subr.bf16.mxu0 0
        %655 = vmatpush1.bf16.msra.mxu0 0
        %656 = vmatprep.subr.bf16.mxu0 0
        %657 = vmatpush1.bf16.msra.mxu0 0
        %658 = vmatprep.subr.bf16.mxu0 0
        %659 = vmatpush1.bf16.msra.mxu0 0
        %660 = vmatprep.subr.bf16.mxu0 0
        %661 = vmatpush1.bf16.msra.mxu0 0
        %662 = vmatprep.subr.bf16.mxu0 0
        %663 = vmatpush1.bf16.msra.mxu0 0
        %664 = vmatprep.subr.bf16.mxu0 0
        %665 = vmatpush1.bf16.msra.mxu0 0
        %666 = vmatprep.subr.bf16.mxu0 0
        %667 = vmatpush1.bf16.msra.mxu0 0
        %668 = vmatprep.mubr.bf16.mxu0 0
        %669 = vmatmul.mubr.bf16.gmra.mrb[0].mxu0 %v630
        %v670 = vpop.f32.mrb[0].mxu0
        %v671 = vadd.f32 %v627, %v670
        %v672 = vpop.f32.mrb[0].mxu0
        %v673 = vpop.f32.mrb[0].mxu0
        %v674 = vpop.f32.mrb[0].mxu0
        %675 = vdwg.mxu0
        %v676 = vpack.c.bf16 %v671, %v671
        %vm677 = vcmask 7168
        %v680 = vsel %vm677, %v676, 0
        %v681 = vmax.f32 %v512, %v540
        %v682 = vmax.f32 %v519, %v547
        %v683 = vmax.f32 %v526, %v554
        %v684 = vmax.f32 %v533, %v561
        %v685 = vmax.f32 %v681, %v568
        %v686 = vmax.f32 %v682, %v575
        %v687 = vmax.f32 %v683, %v582
        %v688 = vmax.f32 %v684, %v589
        %v693 = vsel %vm614, %v595, %v594
        %v694 = vsel %vm616, %v596, %v693
        %v695 = vsel %vm618, %v597, %v694
        %vm697 = vcmask 60416
        %v698 = vsel %vm697, %v695, -inf
        %699 = vmax.xlane.f32.xlu0 %v698
        %v700 = vpop.xlane.xlu0 %699
        %vm701 = vcmask 126016
        %v702 = vsel %vm701, %v695, -inf
        %703 = vmax.xlane.f32.xlu0 %v702
        %v704 = vpop.xlane.xlu0 %703
        %v709 = vsel %vm614, %v686, %v685
        %v710 = vsel %vm616, %v687, %v709
        %v711 = vsel %vm618, %v688, %v710
        %v713 = vsel %vm697, %v711, -inf
        %714 = vmax.xlane.f32.xlu0 %v713
        %v715 = vpop.xlane.xlu0 %714
        %v716 = vsel %vm701, %v711, -inf
        %717 = vmax.xlane.f32.xlu0 %v716
        %v718 = vpop.xlane.xlu0 %717
        %v719 = vsel %vm677, %v700, %v704
        %vm720 = vcmask 15360
        %v721 = vsel %vm720, %v719, %v715
        %vm722 = vcmask 23552
        %v723 = vsel %vm722, %v721, %v718
        %s724 = scalar_lea.vmem %s2, 2
        %v725 = vld [vmem:[%s724] sm:$0x3]
        %v726 = vpack.c.bf16 %v723, %v723
        %s727 = scalar_lea.vmem %s3, 4
        %v728 = vld [vmem:[%s727] sm:$0xf]
        %730 = vset.pattern.permute.xlu0 0
        %731 = vperm.xlu0 %730, %v728
        %v732 = vpop.permute.xlu0 %731
        %v735 = vsel %vm628, %v725, 0
        %v738 = vsel %vm632, %v726, 0
        %740 = vmatprep.subr.bf16.mxu0 0
        %741 = vmatpush1.bf16.msra.mxu0 %v738
        %742 = vmatprep.subr.bf16.mxu0 0
        %743 = vmatpush1.bf16.msra.mxu0 0
        %744 = vmatprep.subr.bf16.mxu0 0
        %745 = vmatpush1.bf16.msra.mxu0 0
        %746 = vmatprep.subr.bf16.mxu0 0
        %747 = vmatpush1.bf16.msra.mxu0 0
        %748 = vmatprep.subr.bf16.mxu0 0
        %749 = vmatpush1.bf16.msra.mxu0 0
        %750 = vmatprep.subr.bf16.mxu0 0
        %751 = vmatpush1.bf16.msra.mxu0 0
        %752 = vmatprep.subr.bf16.mxu0 0
        %753 = vmatpush1.bf16.msra.mxu0 0
        %754 = vmatprep.subr.bf16.mxu0 0
        %755 = vmatpush1.bf16.msra.mxu0 0
        %756 = vmatprep.subr.bf16.mxu0 0
        %757 = vmatpush1.bf16.msra.mxu0 0
        %758 = vmatprep.subr.bf16.mxu0 0
        %759 = vmatpush1.bf16.msra.mxu0 0
        %760 = vmatprep.subr.bf16.mxu0 0
        %761 = vmatpush1.bf16.msra.mxu0 0
        %762 = vmatprep.subr.bf16.mxu0 0
        %763 = vmatpush1.bf16.msra.mxu0 0
        %764 = vmatprep.subr.bf16.mxu0 0
        %765 = vmatpush1.bf16.msra.mxu0 0
        %766 = vmatprep.subr.bf16.mxu0 0
        %767 = vmatpush1.bf16.msra.mxu0 0
        %768 = vmatprep.subr.bf16.mxu0 0
        %769 = vmatpush1.bf16.msra.mxu0 0
        %770 = vmatprep.subr.bf16.mxu0 0
        %771 = vmatpush1.bf16.msra.mxu0 0
        %772 = vmatprep.mubr.bf16.mxu0 0
        %773 = vmatmul.mubr.bf16.gmra.mrb[0].mxu0 %v735
        %v774 = vpop.f32.mrb[0].mxu0
        %v775 = vadd.f32 %v732, %v774
        %v776 = vpop.f32.mrb[0].mxu0
        %v777 = vpop.f32.mrb[0].mxu0
        %v778 = vpop.f32.mrb[0].mxu0
        %779 = vdwg.mxu0
        %v780 = vpack.c.bf16 %v775, %v775
        %782 = vrot.lane.b32.xlu0 %v780, 1
        %v783 = vpop.permute.xlu0 %782
        %v785 = vsel %vm677, 0, %v783
        %vm786 = vcmask 39936
        %v787 = vsel %vm786, %v785, 0
        %v788 = vmax.f32 %v484, %v512
        %v789 = vmax.f32 %v491, %v519
        %v790 = vmax.f32 %v498, %v526
        %v791 = vmax.f32 %v505, %v533
        %v792 = vmax.f32 %v540, %v568
        %v793 = vmax.f32 %v547, %v575
        %v794 = vmax.f32 %v554, %v582
        %v795 = vmax.f32 %v561, %v589
        %v800 = vsel %vm614, %v591, %v590
        %v801 = vsel %vm616, %v592, %v800
        %v802 = vsel %vm618, %v593, %v801
        %vm804 = vcmask 44032
        %v805 = vsel %vm804, %v802, -inf
        %806 = vmax.xlane.f32.xlu0 %v805
        %v807 = vpop.xlane.xlu0 %806
        %vm808 = vcmask 85032
        %v809 = vsel %vm808, %v802, -inf
        %810 = vmax.xlane.f32.xlu0 %v809
        %v811 = vpop.xlane.xlu0 %810
        %vm812 = vcmask 126032
        %v813 = vsel %vm812, %v802, -inf
        %814 = vmax.xlane.f32.xlu0 %v813
        %v815 = vpop.xlane.xlu0 %814
        %v820 = vsel %vm614, %v789, %v788
        %v821 = vsel %vm616, %v790, %v820
        %v822 = vsel %vm618, %v791, %v821
        %v824 = vsel %vm804, %v822, -inf
        %825 = vmax.xlane.f32.xlu0 %v824
        %v826 = vpop.xlane.xlu0 %825
        %v827 = vsel %vm808, %v822, -inf
        %828 = vmax.xlane.f32.xlu0 %v827
        %v829 = vpop.xlane.xlu0 %828
        %v830 = vsel %vm812, %v822, -inf
        %831 = vmax.xlane.f32.xlu0 %v830
        %v832 = vpop.xlane.xlu0 %831
        %v837 = vsel %vm614, %v793, %v792
        %v838 = vsel %vm616, %v794, %v837
        %v839 = vsel %vm618, %v795, %v838
        %v841 = vsel %vm804, %v839, -inf
        %842 = vmax.xlane.f32.xlu0 %v841
        %v843 = vpop.xlane.xlu0 %842
        %v844 = vsel %vm808, %v839, -inf
        %845 = vmax.xlane.f32.xlu0 %v844
        %v846 = vpop.xlane.xlu0 %845
        %v847 = vsel %vm812, %v839, -inf
        %848 = vmax.xlane.f32.xlu0 %v847
        %v849 = vpop.xlane.xlu0 %848
        %v850 = vsel %vm677, %v807, %v811
        %v851 = vsel %vm720, %v850, %v815
        %v852 = vsel %vm722, %v851, %v826
        %v853 = vsel %vm628, %v852, %v829
        %v854 = vsel %vm786, %v853, %v832
        %vm855 = vcmask 48128
        %v856 = vsel %vm855, %v854, %v843
        %vm857 = vcmask 56320
        %v858 = vsel %vm857, %v856, %v846
        %vm859 = vcmask 64512
        %v860 = vsel %vm859, %v858, %v849
        %s861 = scalar_lea.vmem %s2, 4
        %v862 = vld [vmem:[%s861] sm:$0x3]
        %v863 = vpack.c.bf16 %v860, %v860
        %s864 = scalar_lea.vmem %s3, 8
        %v865 = vld [vmem:[%s864] sm:$0xf]
        %867 = vset.pattern.permute.xlu0 0
        %868 = vperm.xlu0 %867, %v865
        %v869 = vpop.permute.xlu0 %868
        %v872 = vsel %vm628, %v862, 0
        %v875 = vsel %vm632, %v863, 0
        %877 = vmatprep.subr.bf16.mxu0 0
        %878 = vmatpush1.bf16.msra.mxu0 %v875
        %879 = vmatprep.subr.bf16.mxu0 0
        %880 = vmatpush1.bf16.msra.mxu0 0
        %881 = vmatprep.subr.bf16.mxu0 0
        %882 = vmatpush1.bf16.msra.mxu0 0
        %883 = vmatprep.subr.bf16.mxu0 0
        %884 = vmatpush1.bf16.msra.mxu0 0
        %885 = vmatprep.subr.bf16.mxu0 0
        %886 = vmatpush1.bf16.msra.mxu0 0
        %887 = vmatprep.subr.bf16.mxu0 0
        %888 = vmatpush1.bf16.msra.mxu0 0
        %889 = vmatprep.subr.bf16.mxu0 0
        %890 = vmatpush1.bf16.msra.mxu0 0
        %891 = vmatprep.subr.bf16.mxu0 0
        %892 = vmatpush1.bf16.msra.mxu0 0
        %893 = vmatprep.subr.bf16.mxu0 0
        %894 = vmatpush1.bf16.msra.mxu0 0
        %895 = vmatprep.subr.bf16.mxu0 0
        %896 = vmatpush1.bf16.msra.mxu0 0
        %897 = vmatprep.subr.bf16.mxu0 0
        %898 = vmatpush1.bf16.msra.mxu0 0
        %899 = vmatprep.subr.bf16.mxu0 0
        %900 = vmatpush1.bf16.msra.mxu0 0
        %901 = vmatprep.subr.bf16.mxu0 0
        %902 = vmatpush1.bf16.msra.mxu0 0
        %903 = vmatprep.subr.bf16.mxu0 0
        %904 = vmatpush1.bf16.msra.mxu0 0
        %905 = vmatprep.subr.bf16.mxu0 0
        %906 = vmatpush1.bf16.msra.mxu0 0
        %907 = vmatprep.subr.bf16.mxu0 0
        %908 = vmatpush1.bf16.msra.mxu0 0
        %909 = vmatprep.mubr.bf16.mxu0 0
        %910 = vmatmul.mubr.bf16.gmra.mrb[0].mxu0 %v872
        %v911 = vpop.f32.mrb[0].mxu0
        %v912 = vadd.f32 %v869, %v911
        %v913 = vpop.f32.mrb[0].mxu0
        %v914 = vpop.f32.mrb[0].mxu0
        %v915 = vpop.f32.mrb[0].mxu0
        %916 = vdwg.mxu0
        %v917 = vpack.c.bf16 %v912, %v912
        %919 = vrot.lane.b32.xlu0 %v917, 5
        %v920 = vpop.permute.xlu0 %919
        %v922 = vsel %vm786, 0, %v920
        %vm923 = vcmask 113664
        %v924 = vsel %vm923, %v922, 0
        %v929 = vsel %vm614, %v433, %v426
        %v930 = vsel %vm616, %v440, %v929
        %v931 = vsel %vm618, %v447, %v930
        %vm933 = vcmask 19456
        %v934 = vsel %vm933, %v931, -inf
        %935 = vmax.xlane.f32.xlu0 %v934
        %v936 = vpop.xlane.xlu0 %935
        %vm937 = vcmask 44048
        %v938 = vsel %vm937, %v931, -inf
        %939 = vmax.xlane.f32.xlu0 %v938
        %v940 = vpop.xlane.xlu0 %939
        %vm941 = vcmask 60456
        %v942 = vsel %vm941, %v931, -inf
        %943 = vmax.xlane.f32.xlu0 %v942
        %v944 = vpop.xlane.xlu0 %943
        %vm945 = vcmask 85056
        %v946 = vsel %vm945, %v931, -inf
        %947 = vmax.xlane.f32.xlu0 %v946
        %v948 = vpop.xlane.xlu0 %947
        %vm949 = vcmask 109648
        %v950 = vsel %vm949, %v931, -inf
        %951 = vmax.xlane.f32.xlu0 %v950
        %v952 = vpop.xlane.xlu0 %951
        %vm953 = vcmask 126056
        %v954 = vsel %vm953, %v931, -inf
        %955 = vmax.xlane.f32.xlu0 %v954
        %v956 = vpop.xlane.xlu0 %955
        %v961 = vsel %vm614, %v462, %v455
        %v962 = vsel %vm616, %v469, %v961
        %v963 = vsel %vm618, %v476, %v962
        %v965 = vsel %vm933, %v963, -inf
        %966 = vmax.xlane.f32.xlu0 %v965
        %v967 = vpop.xlane.xlu0 %966
        %v968 = vsel %vm937, %v963, -inf
        %969 = vmax.xlane.f32.xlu0 %v968
        %v970 = vpop.xlane.xlu0 %969
        %v971 = vsel %vm941, %v963, -inf
        %972 = vmax.xlane.f32.xlu0 %v971
        %v973 = vpop.xlane.xlu0 %972
        %v974 = vsel %vm945, %v963, -inf
        %975 = vmax.xlane.f32.xlu0 %v974
        %v976 = vpop.xlane.xlu0 %975
        %v977 = vsel %vm949, %v963, -inf
        %978 = vmax.xlane.f32.xlu0 %v977
        %v979 = vpop.xlane.xlu0 %978
        %v980 = vsel %vm953, %v963, -inf
        %981 = vmax.xlane.f32.xlu0 %v980
        %v982 = vpop.xlane.xlu0 %981
        %v987 = vsel %vm614, %v491, %v484
        %v988 = vsel %vm616, %v498, %v987
        %v989 = vsel %vm618, %v505, %v988
        %v991 = vsel %vm933, %v989, -inf
        %992 = vmax.xlane.f32.xlu0 %v991
        %v993 = vpop.xlane.xlu0 %992
        %v994 = vsel %vm937, %v989, -inf
        %995 = vmax.xlane.f32.xlu0 %v994
        %v996 = vpop.xlane.xlu0 %995
        %v997 = vsel %vm941, %v989, -inf
        %998 = vmax.xlane.f32.xlu0 %v997
        %v999 = vpop.xlane.xlu0 %998
        %v1000 = vsel %vm945, %v989, -inf
        %1001 = vmax.xlane.f32.xlu0 %v1000
        %v1002 = vpop.xlane.xlu0 %1001
        %v1003 = vsel %vm949, %v989, -inf
        %1004 = vmax.xlane.f32.xlu0 %v1003
        %v1005 = vpop.xlane.xlu0 %1004
        %v1006 = vsel %vm953, %v989, -inf
        %1007 = vmax.xlane.f32.xlu0 %v1006
        %v1008 = vpop.xlane.xlu0 %1007
        %v1013 = vsel %vm614, %v519, %v512
        %v1014 = vsel %vm616, %v526, %v1013
        %v1015 = vsel %vm618, %v533, %v1014
        %v1017 = vsel %vm933, %v1015, -inf
        %1018 = vmax.xlane.f32.xlu0 %v1017
        %v1019 = vpop.xlane.xlu0 %1018
        %v1020 = vsel %vm937, %v1015, -inf
        %1021 = vmax.xlane.f32.xlu0 %v1020
        %v1022 = vpop.xlane.xlu0 %1021
        %v1023 = vsel %vm941, %v1015, -inf
        %1024 = vmax.xlane.f32.xlu0 %v1023
        %v1025 = vpop.xlane.xlu0 %1024
        %v1026 = vsel %vm945, %v1015, -inf
        %1027 = vmax.xlane.f32.xlu0 %v1026
        %v1028 = vpop.xlane.xlu0 %1027
        %v1029 = vsel %vm949, %v1015, -inf
        %1030 = vmax.xlane.f32.xlu0 %v1029
        %v1031 = vpop.xlane.xlu0 %1030
        %v1032 = vsel %vm953, %v1015, -inf
        %1033 = vmax.xlane.f32.xlu0 %v1032
        %v1034 = vpop.xlane.xlu0 %1033
        %v1039 = vsel %vm614, %v547, %v540
        %v1040 = vsel %vm616, %v554, %v1039
        %v1041 = vsel %vm618, %v561, %v1040
        %v1043 = vsel %vm933, %v1041, -inf
        %1044 = vmax.xlane.f32.xlu0 %v1043
        %v1045 = vpop.xlane.xlu0 %1044
        %v1046 = vsel %vm937, %v1041, -inf
        %1047 = vmax.xlane.f32.xlu0 %v1046
        %v1048 = vpop.xlane.xlu0 %1047
        %v1049 = vsel %vm941, %v1041, -inf
        %1050 = vmax.xlane.f32.xlu0 %v1049
        %v1051 = vpop.xlane.xlu0 %1050
        %v1052 = vsel %vm945, %v1041, -inf
        %1053 = vmax.xlane.f32.xlu0 %v1052
        %v1054 = vpop.xlane.xlu0 %1053
        %v1055 = vsel %vm949, %v1041, -inf
        %1056 = vmax.xlane.f32.xlu0 %v1055
        %v1057 = vpop.xlane.xlu0 %1056
        %v1058 = vsel %vm953, %v1041, -inf
        %1059 = vmax.xlane.f32.xlu0 %v1058
        %v1060 = vpop.xlane.xlu0 %1059
        %v1065 = vsel %vm614, %v575, %v568
        %v1066 = vsel %vm616, %v582, %v1065
        %v1067 = vsel %vm618, %v589, %v1066
        %v1069 = vsel %vm933, %v1067, -inf
        %1070 = vmax.xlane.f32.xlu0 %v1069
        %v1071 = vpop.xlane.xlu0 %1070
        %v1072 = vsel %vm937, %v1067, -inf
        %1073 = vmax.xlane.f32.xlu0 %v1072
        %v1074 = vpop.xlane.xlu0 %1073
        %v1075 = vsel %vm941, %v1067, -inf
        %1076 = vmax.xlane.f32.xlu0 %v1075
        %v1077 = vpop.xlane.xlu0 %1076
        %v1078 = vsel %vm945, %v1067, -inf
        %1079 = vmax.xlane.f32.xlu0 %v1078
        %v1080 = vpop.xlane.xlu0 %1079
        %v1081 = vsel %vm949, %v1067, -inf
        %1082 = vmax.xlane.f32.xlu0 %v1081
        %v1083 = vpop.xlane.xlu0 %1082
        %v1084 = vsel %vm953, %v1067, -inf
        %1085 = vmax.xlane.f32.xlu0 %v1084
        %v1086 = vpop.xlane.xlu0 %1085
        %v1087 = vsel %vm677, %v936, %v940
        %v1088 = vsel %vm720, %v1087, %v944
        %v1089 = vsel %vm722, %v1088, %v948
        %v1090 = vsel %vm628, %v1089, %v952
        %v1091 = vsel %vm786, %v1090, %v956
        %v1092 = vsel %vm855, %v1091, %v967
        %v1093 = vsel %vm857, %v1092, %v970
        %v1094 = vsel %vm859, %v1093, %v973
        %vm1095 = vcmask 72704
        %v1096 = vsel %vm1095, %v1094, %v976
        %vm1097 = vcmask 80896
        %v1098 = vsel %vm1097, %v1096, %v979
        %vm1099 = vcmask 89088
        %v1100 = vsel %vm1099, %v1098, %v982
        %vm1101 = vcmask 97280
        %v1102 = vsel %vm1101, %v1100, %v993
        %vm1103 = vcmask 105472
        %v1104 = vsel %vm1103, %v1102, %v996
        %v1105 = vsel %vm923, %v1104, %v999
        %vm1106 = vcmask 121856
        %v1107 = vsel %vm1106, %v1105, %v1002
        %v1108 = vsel %vm677, %v1005, %v1008
        %v1109 = vsel %vm720, %v1108, %v1019
        %v1110 = vsel %vm722, %v1109, %v1022
        %v1111 = vsel %vm628, %v1110, %v1025
        %v1112 = vsel %vm786, %v1111, %v1028
        %v1113 = vsel %vm855, %v1112, %v1031
        %v1114 = vsel %vm857, %v1113, %v1034
        %v1115 = vsel %vm859, %v1114, %v1045
        %v1116 = vsel %vm1095, %v1115, %v1048
        %v1117 = vsel %vm1097, %v1116, %v1051
        %v1118 = vsel %vm1099, %v1117, %v1054
        %v1119 = vsel %vm1101, %v1118, %v1057
        %v1120 = vsel %vm1103, %v1119, %v1060
        %v1121 = vsel %vm923, %v1120, %v1071
        %v1122 = vsel %vm1106, %v1121, %v1074
        %v1123 = vsel %vm677, %v1077, %v1080
        %v1124 = vsel %vm720, %v1123, %v1083
        %v1125 = vsel %vm722, %v1124, %v1086
        %1127 = vrot.lane.b32.xlu0 %v1122, 16
        %v1128 = vpop.permute.xlu0 %1127
        %1131 = vrot.lane.b32.xlu0 %v1125, 32
        %v1132 = vpop.permute.xlu0 %1131
        %vm1134 = vcmask 130048
        %v1135 = vsel %vm1134, %v1107, %v1128
        %vm1136 = vcmask 261120
        %v1137 = vsel %vm1136, %v1135, %v1132
        %s1138 = scalar_lea.vmem %s2, 6
        %v1139 = vld [vmem:[%s1138] sm:$0x3]
        %v1140 = vpack.c.bf16 %v1137, %v1137
        %s1141 = scalar_lea.vmem %s3, 12
        %v1142 = vld [vmem:[%s1141] sm:$0xf]
        %1144 = vset.pattern.permute.xlu0 0
        %1145 = vperm.xlu0 %1144, %v1142
        %v1146 = vpop.permute.xlu0 %1145
        %v1149 = vsel %vm628, %v1139, 0
        %v1152 = vsel %vm632, %v1140, 0
        %1154 = vmatprep.subr.bf16.mxu0 0
        %1155 = vmatpush1.bf16.msra.mxu0 %v1152
        %1156 = vmatprep.subr.bf16.mxu0 0
        %1157 = vmatpush1.bf16.msra.mxu0 0
        %1158 = vmatprep.subr.bf16.mxu0 0
        %1159 = vmatpush1.bf16.msra.mxu0 0
        %1160 = vmatprep.subr.bf16.mxu0 0
        %1161 = vmatpush1.bf16.msra.mxu0 0
        %1162 = vmatprep.subr.bf16.mxu0 0
        %1163 = vmatpush1.bf16.msra.mxu0 0
        %1164 = vmatprep.subr.bf16.mxu0 0
        %1165 = vmatpush1.bf16.msra.mxu0 0
        %1166 = vmatprep.subr.bf16.mxu0 0
        %1167 = vmatpush1.bf16.msra.mxu0 0
        %1168 = vmatprep.subr.bf16.mxu0 0
        %1169 = vmatpush1.bf16.msra.mxu0 0
        %1170 = vmatprep.subr.bf16.mxu0 0
        %1171 = vmatpush1.bf16.msra.mxu0 0
        %1172 = vmatprep.subr.bf16.mxu0 0
        %1173 = vmatpush1.bf16.msra.mxu0 0
        %1174 = vmatprep.subr.bf16.mxu0 0
        %1175 = vmatpush1.bf16.msra.mxu0 0
        %1176 = vmatprep.subr.bf16.mxu0 0
        %1177 = vmatpush1.bf16.msra.mxu0 0
        %1178 = vmatprep.subr.bf16.mxu0 0
        %1179 = vmatpush1.bf16.msra.mxu0 0
        %1180 = vmatprep.subr.bf16.mxu0 0
        %1181 = vmatpush1.bf16.msra.mxu0 0
        %1182 = vmatprep.subr.bf16.mxu0 0
        %1183 = vmatpush1.bf16.msra.mxu0 0
        %1184 = vmatprep.subr.bf16.mxu0 0
        %1185 = vmatpush1.bf16.msra.mxu0 0
        %1186 = vmatprep.mubr.bf16.mxu0 0
        %1187 = vmatmul.mubr.bf16.gmra.mrb[0].mxu0 %v1149
        %v1188 = vpop.f32.mrb[0].mxu0
        %v1189 = vadd.f32 %v1146, %v1188
        %v1190 = vpop.f32.mrb[0].mxu0
        %v1191 = vpop.f32.mrb[0].mxu0
        %v1192 = vpop.f32.mrb[0].mxu0
        %1193 = vdwg.mxu0
        %v1194 = vpack.c.bf16 %v1189, %v1189
        %1196 = vrot.lane.b32.xlu0 %v1194, 14
        %v1197 = vpop.permute.xlu0 %1196
        %v1199 = vsel %vm923, 0, %v1197
        %v1201 = vrot.slane %v787, 6
        %v1203 = vrot.slane %v924, 4
        %v1205 = vrot.slane %v1199, 2
        %v1207 = vsel %vm632, %v680, %v1201
        %vm1208 = vcmask 1043456
        %v1210 = vsel %vm1208, %v1207, %v1203
        %vm1211 = vcmask 1045504
        %v1213 = vsel %vm1211, %v1210, %v1205
        %v1214 = vld [vmem:[#allocation5] sm:$0xff]
        %v1215 = vld [vmem:[#allocation5 + $0x8] sm:$0xff]
        %v1216 = vld [vmem:[#allocation5 + $0x10] sm:$0xff]
        %v1217 = vld [vmem:[#allocation5 + $0x18] sm:$0xff]
        %v1218 = vld [vmem:[#allocation5 + $0x20] sm:$0xff]
        %v1219 = vld [vmem:[#allocation5 + $0x28] sm:$0xff]
        %v1220 = vld [vmem:[#allocation5 + $0x30] sm:$0x11]
        %v1228 = vunpack.c.l.b16 %v1214
        %v1229 = vunpack.c.h.b16 %v1214
        %v1230 = vunpack.c.l.b16 %v1215
        %v1231 = vunpack.c.h.b16 %v1215
        %v1232 = vunpack.c.l.b16 %v1216
        %v1233 = vunpack.c.h.b16 %v1216
        %v1234 = vunpack.c.l.b16 %v1217
        %v1235 = vunpack.c.h.b16 %v1217
        %v1236 = vunpack.c.l.b16 %v1218
        %v1237 = vunpack.c.h.b16 %v1218
        %v1238 = vunpack.c.l.b16 %v1219
        %v1239 = vunpack.c.h.b16 %v1219
        %v1240 = vunpack.c.l.b16 %v1220
        %v1241 = vunpack.c.h.b16 %v1220
        %v1242 = vpack.c.b16 %v1230, %v1228
        %v1243 = vpack.c.b16 %v1231, %v1229
        %v1244 = vpack.c.b16 %v1234, %v1232
        %v1245 = vpack.c.b16 %v1235, %v1233
        %v1246 = vpack.c.b16 %v1238, %v1236
        %v1247 = vpack.c.b16 %v1239, %v1237
        %v1248 = vpack.c.b16 %v1240, %v1240
        %v1249 = vpack.c.b16 %v1241, %v1241
        %vm1256 = vcmask 408576
        %v1257 = vsel %vm1256, %v1213, 0
        %vm1259 = vcmask 1040384
        %v1261 = vsel %vm1259, %v1248, 0
        %v1264 = vsel %vm1259, %v1249, 0
        %1266 = vmatprep.subr.bf16.mxu0 %v1243
        %1267 = vmatpush1.bf16.msra.mxu0 %v1242
        %1268 = vmatprep.subr.bf16.mxu0 %v1245
        %1269 = vmatpush1.bf16.msra.mxu0 %v1244
        %1270 = vmatprep.subr.bf16.mxu0 %v1247
        %1271 = vmatpush1.bf16.msra.mxu0 %v1246
        %1272 = vmatprep.subr.bf16.mxu0 %v1264
        %1273 = vmatpush1.bf16.msra.mxu0 %v1261
        %1274 = vmatprep.subr.bf16.mxu0 0
        %1275 = vmatpush1.bf16.msra.mxu0 0
        %1276 = vmatprep.subr.bf16.mxu0 0
        %1277 = vmatpush1.bf16.msra.mxu0 0
        %1278 = vmatprep.subr.bf16.mxu0 0
        %1279 = vmatpush1.bf16.msra.mxu0 0
        %1280 = vmatprep.subr.bf16.mxu0 0
        %1281 = vmatpush1.bf16.msra.mxu0 0
        %1282 = vmatprep.subr.bf16.mxu0 0
        %1283 = vmatpush1.bf16.msra.mxu0 0
        %1284 = vmatprep.subr.bf16.mxu0 0
        %1285 = vmatpush1.bf16.msra.mxu0 0
        %1286 = vmatprep.subr.bf16.mxu0 0
        %1287 = vmatpush1.bf16.msra.mxu0 0
        %1288 = vmatprep.subr.bf16.mxu0 0
        %1289 = vmatpush1.bf16.msra.mxu0 0
        %1290 = vmatprep.subr.bf16.mxu0 0
        %1291 = vmatpush1.bf16.msra.mxu0 0
        %1292 = vmatprep.subr.bf16.mxu0 0
        %1293 = vmatpush1.bf16.msra.mxu0 0
        %1294 = vmatprep.subr.bf16.mxu0 0
        %1295 = vmatpush1.bf16.msra.mxu0 0
        %1296 = vmatprep.subr.bf16.mxu0 0
        %1297 = vmatpush1.bf16.msra.mxu0 0
        %1298 = vmatprep.mubr.bf16.mxu0 0
        %1299 = vmatmul.mubr.bf16.gmra.mrb[0].mxu0 %v1257
        %v1300 = vpop.f32.mrb[0].mxu0
        %v1301 = vadd.f32 0.0, %v1300
        %v1302 = vpop.f32.mrb[0].mxu0
        %v1303 = vadd.f32 0.0, %v1302
        %v1304 = vpop.f32.mrb[0].mxu0
        %v1305 = vadd.f32 0.0, %v1304
        %v1306 = vpop.f32.mrb[0].mxu0
        %v1307 = vadd.f32 0.0, %v1306
        %1308 = vdwg.mxu0
        %v1309 = vpack.c.bf16 %v1305, %v1301
        %v1310 = vpack.c.bf16 %v1307, %v1303
        %v1312 = vcombine.high %v418, %v418
        %v1314 = vpack.c.bf16 %v418, %v418
        %v1315 = vpack.c.bf16 %v1312, %v1312
        %v1316 = vlaneseq
        %v1317 = vand.u32 %v1316, 127
        %v1318 = vadd.s32 %v1317, 128
        %vm1319 = vcmp.lt.s32.totalorder %v1317, 0
        %v1320 = vsub.s32 0, %v1317
        %v1321 = vsel %vm1319, %v1320, %v1317
        %v1322 = vshrl.u32 %v1321, 4
        %v1323 = vand.u32 %v1321, 15
        %v1324 = vsub.s32 0, %v1323
        %v1325 = vsel %vm1319, %v1324, %v1323
        %vm1326 = vcmp.lt.s32.totalorder %v1318, 0
        %v1327 = vsub.s32 0, %v1318
        %v1328 = vsel %vm1326, %v1327, %v1318
        %v1329 = vshrl.u32 %v1328, 4
        %v1330 = vand.u32 %v1328, 15
        %v1331 = vsub.s32 0, %v1330
        %v1332 = vsel %vm1326, %v1331, %v1330
        %vm1333 = vcmp.ne.s32.totalorder %v1325, 0
        %vm1334 = vcmp.ne.s32.totalorder %v1332, 0
        %vm1335 = vcmp.lt.s32.totalorder %v1325, 0
        %vm1336 = vcmp.lt.s32.totalorder %v1332, 0
        %vm1337 = vmand %vm1335, %vm1333
        %vm1338 = vmand %vm1336, %vm1334
        %v1339 = vadd.s32 %v1325, 16
        %v1340 = vadd.s32 %v1332, 16
        %v1341 = vsel %vm1337, %v1339, %v1325
        %v1342 = vsel %vm1338, %v1340, %v1332
        %vm1343 = vcmp.ge.s32.totalorder %v1341, 1
        %vm1344 = vcmp.ge.s32.totalorder %v1342, 1
        %vm1345 = vcmp.le.s32.totalorder %v1341, 14
        %vm1346 = vcmp.le.s32.totalorder %v1342, 14
        %1351 = vrot.lane.b32.xlu0 %v1309, 17
        %v1352 = vpop.permute.xlu0 %1351
        %1353 = vrot.lane.b32.xlu0 %v1310, 17
        %v1354 = vpop.permute.xlu0 %1353
        %1355 = vrot.lane.b32.xlu0 %v1314, 17
        %v1356 = vpop.permute.xlu0 %1355
        %1357 = vrot.lane.b32.xlu0 %v1315, 17
        %v1358 = vpop.permute.xlu0 %1357
        %vm1359 = vcmask 138240
        %v1360 = vsel %vm1359, %v1352, %v1354
        %v1361 = vsel %vm1359, %v1356, %v1358
        %vm1364 = vcmask 138240
        %v1366 = vsel %vm1364, 0, %v1352
        %v1369 = vsel %vm1364, 0, %v1356
        %v1372 = vsel %vm1364, %v1354, 0
        %v1375 = vsel %vm1364, %v1358, 0
        %v1377 = vsel %vm1343, 1, 0
        %v1378 = vsel %vm1344, 1, 0
        %vm1379 = vcmp.eq.s32.totalorder %v1377, 1
        %vm1380 = vcmp.eq.s32.totalorder %v1378, 1
        %vm1381 = vmpackc.low %vm1380, %vm1379
        %v1382 = vsel %vm1381, 65537, 0
        %v1383 = vlaneseq
        %v1384 = vshrl.u32 %v1383, 7
        %v1385 = vsub.s32 0, %v1384
        %v1386 = vrot.slane %v1382, %v1385
        %v1387 = vlaneseq
        %v1388 = vshrl.u32 %v1387, 7
        %v1389 = vsub.s32 4, %v1388
        %v1390 = vrot.slane %v1382, %v1389
        %vm1391 = vcmp.ne.s16.totalorder %v1386, 0
        %vm1392 = vcmp.ne.s16.totalorder %v1390, 0
        %v1393 = vsel %vm1391, %v1366, 0
        %v1394 = vsel %vm1392, %v1360, 0
        %v1395 = vsel %vm1391, %v1369, 0
        %v1396 = vsel %vm1392, %v1361, 0
        %v1397 = vsel %vm1345, 1, 0
        %v1398 = vsel %vm1346, 1, 0
        %vm1399 = vcmp.eq.s32.totalorder %v1397, 1
        %vm1400 = vcmp.eq.s32.totalorder %v1398, 1
        %vm1401 = vmpackc.low %vm1400, %vm1399
        %v1402 = vsel %vm1401, 65537, 0
        %v1403 = vlaneseq
        %v1404 = vshrl.u32 %v1403, 7
        %v1405 = vsub.s32 0, %v1404
        %v1406 = vrot.slane %v1402, %v1405
        %v1407 = vlaneseq
        %v1408 = vshrl.u32 %v1407, 7
        %v1409 = vsub.s32 4, %v1408
        %v1410 = vrot.slane %v1402, %v1409
        %1411 = vrot.lane.b32.xlu0 %v1406, 2
        %v1412 = vpop.permute.xlu0 %1411
        %1413 = vrot.lane.b32.xlu0 %v1410, 2
        %v1414 = vpop.permute.xlu0 %1413
        %vm1415 = vcmask 15360
        %v1416 = vsel %vm1415, %v1412, %v1414
        %vm1417 = vcmp.ne.s16.totalorder %v1412, 0
        %vm1418 = vcmp.ne.s16.totalorder %v1416, 0
        %vm1419 = vcmp.ne.s16.totalorder %v1414, 0
        %v1420 = vsel %vm1417, %v1366, 0
        %v1421 = vsel %vm1418, %v1360, 0
        %v1422 = vsel %vm1419, %v1372, 0
        %v1423 = vsel %vm1417, %v1369, 0
        %v1424 = vsel %vm1418, %v1361, 0
        %v1425 = vsel %vm1419, %v1375, 0
        %1426 = vrot.lane.b32.xlu0 %v1386, 16
        %v1427 = vpop.permute.xlu0 %1426
        %1428 = vrot.lane.b32.xlu0 %v1390, 16
        %v1429 = vpop.permute.xlu0 %1428
        %vm1430 = vcmask 130048
        %v1431 = vsel %vm1430, %v1427, %v1429
        %vm1432 = vcmp.ne.s16.totalorder %v1427, 0
        %vm1433 = vcmp.ne.s16.totalorder %v1431, 0
        %vm1434 = vcmp.ne.s16.totalorder %v1429, 0
        %v1435 = vsel %vm1432, %v1366, 0
        %v1436 = vsel %vm1433, %v1360, 0
        %v1437 = vsel %vm1434, %v1372, 0
        %v1438 = vsel %vm1432, %v1369, 0
        %v1439 = vsel %vm1433, %v1361, 0
        %v1440 = vsel %vm1434, %v1375, 0
        %1441 = vrot.lane.b32.xlu0 %v1406, 18
        %v1442 = vpop.permute.xlu0 %1441
        %1443 = vrot.lane.b32.xlu0 %v1410, 18
        %v1444 = vpop.permute.xlu0 %1443
        %vm1445 = vcmask 146432
        %v1446 = vsel %vm1445, %v1442, %v1444
        %vm1447 = vcmp.ne.s16.totalorder %v1442, 0
        %vm1448 = vcmp.ne.s16.totalorder %v1446, 0
        %vm1449 = vcmp.ne.s16.totalorder %v1444, 0
        %v1450 = vsel %vm1447, %v1366, 0
        %v1451 = vsel %vm1448, %v1360, 0
        %v1452 = vsel %vm1449, %v1372, 0
        %v1453 = vsel %vm1447, %v1369, 0
        %v1454 = vsel %vm1448, %v1361, 0
        %v1455 = vsel %vm1449, %v1375, 0
        %1456 = vrot.lane.b32.xlu0 %v1386, 32
        %v1457 = vpop.permute.xlu0 %1456
        %1458 = vrot.lane.b32.xlu0 %v1390, 32
        %v1459 = vpop.permute.xlu0 %1458
        %vm1460 = vcmask 261120
        %v1461 = vsel %vm1460, %v1457, %v1459
        %vm1462 = vcmp.ne.s16.totalorder %v1457, 0
        %vm1463 = vcmp.ne.s16.totalorder %v1461, 0
        %vm1464 = vcmp.ne.s16.totalorder %v1459, 0
        %v1465 = vsel %vm1462, %v1366, 0
        %v1466 = vsel %vm1463, %v1360, 0
        %v1467 = vsel %vm1464, %v1372, 0
        %v1468 = vsel %vm1462, %v1369, 0
        %v1469 = vsel %vm1463, %v1361, 0
        %v1470 = vsel %vm1464, %v1375, 0
        %1471 = vrot.lane.b32.xlu0 %v1406, 34
        %v1472 = vpop.permute.xlu0 %1471
        %1473 = vrot.lane.b32.xlu0 %v1410, 34
        %v1474 = vpop.permute.xlu0 %1473
        %vm1475 = vcmask 277504
        %v1476 = vsel %vm1475, %v1472, %v1474
        %vm1477 = vcmp.ne.s16.totalorder %v1472, 0
        %vm1478 = vcmp.ne.s16.totalorder %v1476, 0
        %vm1479 = vcmp.ne.s16.totalorder %v1474, 0
        %v1480 = vsel %vm1477, %v1366, 0
        %v1481 = vsel %vm1478, %v1360, 0
        %v1482 = vsel %vm1479, %v1372, 0
        %v1483 = vsel %vm1477, %v1369, 0
        %v1484 = vsel %vm1478, %v1361, 0
        %v1485 = vsel %vm1479, %v1375, 0
        %vm1490 = vcmask 1041408
        %v1491 = vrot.slane %v1366, 6
        %v1492 = vrot.slane %v1360, 6
        %v1493 = vrot.slane %v1372, 6
        %v1494 = vrot.slane %v1369, 6
        %v1495 = vsel %vm1490, %v1491, %v1494
        %v1496 = vrot.slane %v1361, 6
        %v1497 = vsel %vm1490, %v1492, %v1496
        %v1498 = vrot.slane %v1375, 6
        %v1499 = vsel %vm1490, %v1493, %v1498
        %1500 = vrot.lane.b32.xlu0 %v1491, 127
        %v1501 = vpop.permute.xlu0 %1500
        %1502 = vrot.lane.b32.xlu0 %v1492, 127
        %v1503 = vpop.permute.xlu0 %1502
        %1504 = vrot.lane.b32.xlu0 %v1493, 127
        %v1505 = vpop.permute.xlu0 %1504
        %1506 = vrot.lane.b32.xlu0 %v1495, 127
        %v1507 = vpop.permute.xlu0 %1506
        %1508 = vrot.lane.b32.xlu0 %v1497, 127
        %v1509 = vpop.permute.xlu0 %1508
        %1510 = vrot.lane.b32.xlu0 %v1499, 127
        %v1511 = vpop.permute.xlu0 %1510
        %vm1512 = vcmask 1039360
        %v1513 = vsel %vm1512, %v1501, %v1503
        %v1514 = vsel %vm1512, %v1503, %v1505
        %v1515 = vsel %vm1512, %v1507, %v1509
        %v1516 = vsel %vm1512, %v1509, %v1511
        %vm1523 = vcmask 1043456
        %v1524 = vrot.slane %v1420, 4
        %v1525 = vrot.slane %v1421, 4
        %v1526 = vrot.slane %v1422, 4
        %v1527 = vrot.slane %v1423, 4
        %v1528 = vsel %vm1523, %v1524, %v1527
        %v1529 = vrot.slane %v1424, 4
        %v1530 = vsel %vm1523, %v1525, %v1529
        %v1531 = vrot.slane %v1425, 4
        %v1532 = vsel %vm1523, %v1526, %v1531
        %1533 = vrot.lane.b32.xlu0 %v1524, 126
        %v1534 = vpop.permute.xlu0 %1533
        %1535 = vrot.lane.b32.xlu0 %v1525, 126
        %v1536 = vpop.permute.xlu0 %1535
        %1537 = vrot.lane.b32.xlu0 %v1526, 126
        %v1538 = vpop.permute.xlu0 %1537
        %1539 = vrot.lane.b32.xlu0 %v1528, 126
        %v1540 = vpop.permute.xlu0 %1539
        %1541 = vrot.lane.b32.xlu0 %v1530, 126
        %v1542 = vpop.permute.xlu0 %1541
        %1543 = vrot.lane.b32.xlu0 %v1532, 126
        %v1544 = vpop.permute.xlu0 %1543
        %vm1545 = vcmask 1031168
        %v1546 = vsel %vm1545, %v1534, %v1536
        %v1547 = vsel %vm1545, %v1536, %v1538
        %v1548 = vsel %vm1545, %v1540, %v1542
        %v1549 = vsel %vm1545, %v1542, %v1544
        %vm1556 = vcmask 1045504
        %v1557 = vrot.slane %v1435, 2
        %v1558 = vrot.slane %v1436, 2
        %v1559 = vrot.slane %v1437, 2
        %v1560 = vrot.slane %v1438, 2
        %v1561 = vsel %vm1556, %v1557, %v1560
        %v1562 = vrot.slane %v1439, 2
        %v1563 = vsel %vm1556, %v1558, %v1562
        %v1564 = vrot.slane %v1440, 2
        %v1565 = vsel %vm1556, %v1559, %v1564
        %1566 = vrot.lane.b32.xlu0 %v1557, 112
        %v1567 = vpop.permute.xlu0 %1566
        %1568 = vrot.lane.b32.xlu0 %v1558, 112
        %v1569 = vpop.permute.xlu0 %1568
        %1570 = vrot.lane.b32.xlu0 %v1559, 112
        %v1571 = vpop.permute.xlu0 %1570
        %1572 = vrot.lane.b32.xlu0 %v1561, 112
        %v1573 = vpop.permute.xlu0 %1572
        %1574 = vrot.lane.b32.xlu0 %v1563, 112
        %v1575 = vpop.permute.xlu0 %1574
        %1576 = vrot.lane.b32.xlu0 %v1565, 112
        %v1577 = vpop.permute.xlu0 %1576
        %vm1578 = vcmask 916480
        %v1579 = vsel %vm1578, %v1567, %v1569
        %v1580 = vsel %vm1578, %v1569, %v1571
        %v1581 = vsel %vm1578, %v1573, %v1575
        %v1582 = vsel %vm1578, %v1575, %v1577
        %1585 = vrot.lane.b32.xlu0 %v1366, 111
        %v1586 = vpop.permute.xlu0 %1585
        %1587 = vrot.lane.b32.xlu0 %v1360, 111
        %v1588 = vpop.permute.xlu0 %1587
        %1589 = vrot.lane.b32.xlu0 %v1372, 111
        %v1590 = vpop.permute.xlu0 %1589
        %1591 = vrot.lane.b32.xlu0 %v1369, 111
        %v1592 = vpop.permute.xlu0 %1591
        %1593 = vrot.lane.b32.xlu0 %v1361, 111
        %v1594 = vpop.permute.xlu0 %1593
        %1595 = vrot.lane.b32.xlu0 %v1375, 111
        %v1596 = vpop.permute.xlu0 %1595
        %vm1597 = vcmask 908288
        %v1598 = vsel %vm1597, %v1586, %v1588
        %v1599 = vsel %vm1597, %v1588, %v1590
        %v1600 = vsel %vm1597, %v1592, %v1594
        %v1601 = vsel %vm1597, %v1594, %v1596
        %v1610 = vrot.slane %v1450, 6
        %v1611 = vrot.slane %v1451, 6
        %v1612 = vrot.slane %v1452, 6
        %v1613 = vrot.slane %v1453, 6
        %v1614 = vsel %vm1490, %v1610, %v1613
        %v1615 = vrot.slane %v1454, 6
        %v1616 = vsel %vm1490, %v1611, %v1615
        %v1617 = vrot.slane %v1455, 6
        %v1618 = vsel %vm1490, %v1612, %v1617
        %1619 = vrot.lane.b32.xlu0 %v1610, 110
        %v1620 = vpop.permute.xlu0 %1619
        %1621 = vrot.lane.b32.xlu0 %v1611, 110
        %v1622 = vpop.permute.xlu0 %1621
        %1623 = vrot.lane.b32.xlu0 %v1612, 110
        %v1624 = vpop.permute.xlu0 %1623
        %1625 = vrot.lane.b32.xlu0 %v1614, 110
        %v1626 = vpop.permute.xlu0 %1625
        %1627 = vrot.lane.b32.xlu0 %v1616, 110
        %v1628 = vpop.permute.xlu0 %1627
        %1629 = vrot.lane.b32.xlu0 %v1618, 110
        %v1630 = vpop.permute.xlu0 %1629
        %vm1631 = vcmask 900096
        %v1632 = vsel %vm1631, %v1620, %v1622
        %v1633 = vsel %vm1631, %v1622, %v1624
        %v1634 = vsel %vm1631, %v1626, %v1628
        %v1635 = vsel %vm1631, %v1628, %v1630
        %v1642 = vrot.slane %v1465, 4
        %v1643 = vrot.slane %v1466, 4
        %v1644 = vrot.slane %v1467, 4
        %v1645 = vrot.slane %v1468, 4
        %v1646 = vsel %vm1523, %v1642, %v1645
        %v1647 = vrot.slane %v1469, 4
        %v1648 = vsel %vm1523, %v1643, %v1647
        %v1649 = vrot.slane %v1470, 4
        %v1650 = vsel %vm1523, %v1644, %v1649
        %1651 = vrot.lane.b32.xlu0 %v1642, 96
        %v1652 = vpop.permute.xlu0 %1651
        %1653 = vrot.lane.b32.xlu0 %v1643, 96
        %v1654 = vpop.permute.xlu0 %1653
        %1655 = vrot.lane.b32.xlu0 %v1644, 96
        %v1656 = vpop.permute.xlu0 %1655
        %1657 = vrot.lane.b32.xlu0 %v1646, 96
        %v1658 = vpop.permute.xlu0 %1657
        %1659 = vrot.lane.b32.xlu0 %v1648, 96
        %v1660 = vpop.permute.xlu0 %1659
        %1661 = vrot.lane.b32.xlu0 %v1650, 96
        %v1662 = vpop.permute.xlu0 %1661
        %vm1663 = vcmask 785408
        %v1664 = vsel %vm1663, %v1652, %v1654
        %v1665 = vsel %vm1663, %v1654, %v1656
        %v1666 = vsel %vm1663, %v1658, %v1660
        %v1667 = vsel %vm1663, %v1660, %v1662
        %v1668 = vrot.slane %v1366, 2
        %v1669 = vrot.slane %v1360, 2
        %v1670 = vrot.slane %v1372, 2
        %v1671 = vrot.slane %v1369, 2
        %v1672 = vsel %vm1556, %v1668, %v1671
        %v1673 = vrot.slane %v1361, 2
        %v1674 = vsel %vm1556, %v1669, %v1673
        %v1675 = vrot.slane %v1375, 2
        %v1676 = vsel %vm1556, %v1670, %v1675
        %1677 = vrot.lane.b32.xlu0 %v1668, 95
        %v1678 = vpop.permute.xlu0 %1677
        %1679 = vrot.lane.b32.xlu0 %v1669, 95
        %v1680 = vpop.permute.xlu0 %1679
        %1681 = vrot.lane.b32.xlu0 %v1670, 95
        %v1682 = vpop.permute.xlu0 %1681
        %1683 = vrot.lane.b32.xlu0 %v1672, 95
        %v1684 = vpop.permute.xlu0 %1683
        %1685 = vrot.lane.b32.xlu0 %v1674, 95
        %v1686 = vpop.permute.xlu0 %1685
        %1687 = vrot.lane.b32.xlu0 %v1676, 95
        %v1688 = vpop.permute.xlu0 %1687
        %vm1689 = vcmask 777216
        %v1690 = vsel %vm1689, %v1678, %v1680
        %v1691 = vsel %vm1689, %v1680, %v1682
        %v1692 = vsel %vm1689, %v1684, %v1686
        %v1693 = vsel %vm1689, %v1686, %v1688
        %1702 = vrot.lane.b32.xlu0 %v1480, 94
        %v1703 = vpop.permute.xlu0 %1702
        %1704 = vrot.lane.b32.xlu0 %v1481, 94
        %v1705 = vpop.permute.xlu0 %1704
        %1706 = vrot.lane.b32.xlu0 %v1482, 94
        %v1707 = vpop.permute.xlu0 %1706
        %1708 = vrot.lane.b32.xlu0 %v1483, 94
        %v1709 = vpop.permute.xlu0 %1708
        %1710 = vrot.lane.b32.xlu0 %v1484, 94
        %v1711 = vpop.permute.xlu0 %1710
        %1712 = vrot.lane.b32.xlu0 %v1485, 94
        %v1713 = vpop.permute.xlu0 %1712
        %vm1714 = vcmask 769024
        %v1715 = vsel %vm1714, %v1703, %v1705
        %v1716 = vsel %vm1714, %v1705, %v1707
        %v1717 = vsel %vm1714, %v1709, %v1711
        %v1718 = vsel %vm1714, %v1711, %v1713
        %v1723 = vsel %vm632, %v1395, %v1513
        %v1727 = vsel %vm632, %v1396, %v1514
        %v1731 = vsel %vm1208, %v1515, %v1546
        %v1735 = vsel %vm1208, %v1516, %v1547
        %v1739 = vsel %vm1211, %v1548, %v1579
        %v1743 = vsel %vm1211, %v1549, %v1580
        %v1747 = vsel %vm632, %v1600, %v1632
        %v1751 = vsel %vm632, %v1601, %v1633
        %v1755 = vsel %vm1208, %v1634, %v1664
        %v1759 = vsel %vm1208, %v1635, %v1665
        %v1763 = vsel %vm1211, %v1666, %v1690
        %v1767 = vsel %vm1211, %v1667, %v1691
        %v1769 = vld [vmem:[%s5] sm:$0xf]
        %v1770 = vld [vmem:[%s6] sm:$0xf]
        %1772 = vset.pattern.permute.xlu0 0
        %1773 = vperm.xlu0 %1772, %v1770
        %v1774 = vpop.permute.xlu0 %1773
        %v1778 = vunpack.c.l.s4 1983009808
        %v1779 = vunpack.c.0.s8 %v1778
        %v1780 = vlaneseq
        %v1781 = vshrl.u32 %v1780, 7
        %v1782 = vsub.s32 %v1779, %v1781
        %v1783 = vrot.slane %v1769, %v1782
        %v1784 = vcombine.high %v1783, %v1783
        %vm1786 = vcmask 424960
        %v1788 = vsel %vm1786, %v1784, 0
        %v1791 = vsel %vm632, %v1717, 0
        %v1794 = vsel %vm632, %v1718, 0
        %1796 = vmatprep.subr.bf16.mxu0 %v1394
        %1797 = vmatpush1.bf16.msra.mxu0 %v1393
        %1798 = vmatprep.subr.bf16.mxu0 %v1727
        %1799 = vmatpush1.bf16.msra.mxu0 %v1723
        %1800 = vmatprep.subr.bf16.mxu0 %v1735
        %1801 = vmatpush1.bf16.msra.mxu0 %v1731
        %1802 = vmatprep.subr.bf16.mxu0 %v1743
        %1803 = vmatpush1.bf16.msra.mxu0 %v1739
        %1804 = vmatprep.subr.bf16.mxu0 %v1582
        %1805 = vmatpush1.bf16.msra.mxu0 %v1581
        %1806 = vmatprep.subr.bf16.mxu0 %v1599
        %1807 = vmatpush1.bf16.msra.mxu0 %v1598
        %1808 = vmatprep.subr.bf16.mxu0 %v1751
        %1809 = vmatpush1.bf16.msra.mxu0 %v1747
        %1810 = vmatprep.subr.bf16.mxu0 %v1759
        %1811 = vmatpush1.bf16.msra.mxu0 %v1755
        %1812 = vmatprep.subr.bf16.mxu0 %v1767
        %1813 = vmatpush1.bf16.msra.mxu0 %v1763
        %1814 = vmatprep.subr.bf16.mxu0 %v1693
        %1815 = vmatpush1.bf16.msra.mxu0 %v1692
        %1816 = vmatprep.subr.bf16.mxu0 %v1716
        %1817 = vmatpush1.bf16.msra.mxu0 %v1715
        %1818 = vmatprep.subr.bf16.mxu0 %v1794
        %1819 = vmatpush1.bf16.msra.mxu0 %v1791
        %1820 = vmatprep.subr.bf16.mxu0 0
        %1821 = vmatpush1.bf16.msra.mxu0 0
        %1822 = vmatprep.subr.bf16.mxu0 0
        %1823 = vmatpush1.bf16.msra.mxu0 0
        %1824 = vmatprep.subr.bf16.mxu0 0
        %1825 = vmatpush1.bf16.msra.mxu0 0
        %1826 = vmatprep.subr.bf16.mxu0 0
        %1827 = vmatpush1.bf16.msra.mxu0 0
        %1828 = vmatprep.mubr.bf16.mxu0 %v1788
        %1829 = vmatmul.mubr.bf16.gmra.mrb[0].mxu0 %v1783
        %v1830 = vpop.f32.mrb[0].mxu0
        %v1831 = vadd.f32 %v1774, %v1830
        %v1832 = vpop.f32.mrb[0].mxu0
        %v1833 = vadd.f32 %v1774, %v1832
        %v1834 = vpop.f32.mrb[0].mxu0
        %v1835 = vpop.f32.mrb[0].mxu0
        %1836 = vdwg.mxu0
        %v1839 = vcombine.low %v1831, %v1833
        %1841 = vst [vmem:[%s381] sm:$0xff] %v1839
        %v1842 = vsel %vm1208, %v1831, 0.0
        %v1843 = vsel %vm1208, %v1833, 0.0
        %v1844 = vadd.f32 %v1842, %v1843
        %1845 = vadd.xlane.f32.xlu0 %v1844
        %v1846 = vpop.xlane.xlu0 %1845
        %vm1847 = vcmask 3072
        %1848 = vst.msk [vmem:[%s402] sm:$0xf] %vm1847, %v1846
        %v1849 = vmul.f32 %v1831, %v1831
        %v1850 = vmul.f32 %v1833, %v1833
        %v1851 = vsel %vm1208, %v1849, 0.0
        %v1852 = vsel %vm1208, %v1850, 0.0
        %v1853 = vadd.f32 %v1851, %v1852
        %1854 = vadd.xlane.f32.xlu0 %v1853
        %v1855 = vpop.xlane.xlu0 %1854
        %1856 = vst.msk [vmem:[%s406] sm:$0xf] %vm1847, %v1855
        %s1857 = sand.u32 %s193, 1
        %s1858 = scalar_lea.sflag [#allocation4], %s1857
        %s1859 = sand.u32 %s193, 1
        %s1860 = smul.addr %s1859, 8
        %s1861 = scalar_lea.vmem [#allocation7], %s1860
        %p1862 = scmp.lt.s32.totalorder %s28, 1
        %s1863 = scalar_select %p1862, %s28, 1
        %s1864 = smul.addr %s1863, 4
        %s1865 = scalar_lea.vmem %s8, %s1864
        %p1866 = scmp.lt.s32.totalorder %s28, 1
        %s1867 = scalar_select %p1866, %s28, 1
        %s1868 = smul.addr %s1867, 4
        %s1869 = scalar_lea.vmem %s9, %s1868
        // Predicated region
        $region57: #{tpu_custom_call.1} parent=47 // pred_check
          %p1870 = pneg %p203
        $region58: #{tpu_custom_call.1} parent=47 // pred_check_branch
          %1872 = sbr.rel (%p1870) target = $region60
        $region59: #{tpu_custom_call.1} parent=47 // pred_region
          %s1874 = ssub.s32 128, 128
          %1875 = vsyncadd %s1858, %s1874
          %s1876 = smul.addr %s28, 2
          %s1877 = smul.addr %s1876, 64
          %s1878 = scalar_lea.hbm %s7, %s1877
          %s1880 = sshll.u32 %s1861, 4
          %s1881 = int_to_ptr.vmem [resolvable:$true] %s1880
          %1883 = dma.vmem_to_hbm [thread:$0]  %s1881, 128, %s1878, %s1858
        $region60: #{tpu_custom_call.1} parent=47 // pred_fallthru
          _
        // Predicated region
        $region61: #{tpu_custom_call.1} parent=47 // pred_check
          %p1884 = pneg %p229
        $region62: #{tpu_custom_call.1} parent=47 // pred_check_branch
          %1886 = sbr.rel (%p1884) target = $region64
        $region63: #{tpu_custom_call.1} parent=47 // pred_region
          _
        $region64: #{tpu_custom_call.1} parent=47 // pred_fallthru
          _
        // Predicated region
        $region65: #{tpu_custom_call.1} parent=47 // pred_check
          %p1887 = pneg %p255
        $region66: #{tpu_custom_call.1} parent=47 // pred_check_branch
          %1889 = sbr.rel (%p1887) target = $region68
        $region67: #{tpu_custom_call.1} parent=47 // pred_region
          _
        $region68: #{tpu_custom_call.1} parent=47 // pred_fallthru
          _
      $region48: #{tpu_custom_call.1} parent=5 // pred_fallthru
        _
      %p1890 = scmp.le.s32.totalorder 2, %s23
      // Predicated region
      $region69: #{tpu_custom_call.1} parent=5 // pred_check
        %p1891 = pneg %p1890
      $region70: #{tpu_custom_call.1} parent=5 // pred_check_branch
        %1893 = sbr.rel (%p1891) target = $region72
      $region71: #{tpu_custom_call.1} parent=5 // pred_region
        %s1894 = ssub.s32 %s23, 2
        // Predicated region
        $region73: #{tpu_custom_call.1} parent=71 // pred_check
          %p1895 = pneg %p209
        $region74: #{tpu_custom_call.1} parent=71 // pred_check_branch
          %1897 = sbr.rel (%p1895) target = $region76
        $region75: #{tpu_custom_call.1} parent=71 // pred_region
          %s1898 = sand.u32 %s194, 1
          %s1899 = scalar_lea.sflag [#allocation4], %s1898
          %s1900 = sand.u32 %s194, 1
          %s1901 = smul.addr %s1900, 8
          %s1902 = scalar_lea.vmem [#allocation7], %s1901
          %1903 = dma.done %s1899, 128
        $region76: #{tpu_custom_call.1} parent=71 // pred_fallthru
          _
        // Predicated region
        $region77: #{tpu_custom_call.1} parent=71 // pred_check
          %p1904 = pneg %p235
        $region78: #{tpu_custom_call.1} parent=71 // pred_check_branch
          %1906 = sbr.rel (%p1904) target = $region80
        $region79: #{tpu_custom_call.1} parent=71 // pred_region
          %p1907 = scmp.lt.s32.totalorder %s29, 1
          %s1908 = scalar_select %p1907, %s29, 1
          %s1909 = smul.addr %s1908, 4
          %s1910 = scalar_lea.vmem %s8, %s1909
        $region80: #{tpu_custom_call.1} parent=71 // pred_fallthru
          _
        // Predicated region
        $region81: #{tpu_custom_call.1} parent=71 // pred_check
          %p1911 = pneg %p261
        $region82: #{tpu_custom_call.1} parent=71 // pred_check_branch
          %1913 = sbr.rel (%p1911) target = $region84
        $region83: #{tpu_custom_call.1} parent=71 // pred_region
          %p1914 = scmp.lt.s32.totalorder %s29, 1
          %s1915 = scalar_select %p1914, %s29, 1
          %s1916 = smul.addr %s1915, 4
          %s1917 = scalar_lea.vmem %s9, %s1916
        $region84: #{tpu_custom_call.1} parent=71 // pred_fallthru
          _
      $region72: #{tpu_custom_call.1} parent=5 // pred_fallthru
        _
    $region6: #{tpu_custom_call.1} parent=1 // loop_footer
      %s27 = sadd.s32 1, %s23
    $region7: #{tpu_custom_call.1} parent=1 // loop_footer_branch
      %22 = sbr.rel target = $region3
    $region8: #{tpu_custom_call.1} parent=1 // loop_exit
      _
    %1918 = vsyncpa [#allocation3], 1
    %s1919 = scalar_lea.sflag [#allocation3], 1
    %1920 = vsyncpa %s1919, 1
    %1921 = vsyncpa [#allocation6], 1
    %1922 = vsyncpa [#allocation4], 1
    %s1923 = scalar_lea.sflag [#allocation4], 1
    %1924 = vsyncpa %s1923, 1

</llo_original>
